<compile_context>
chip_gen: v6e
topology: v6e:2x2x1
jax: 0.10.0
libtpu: 0.0.40
codegen_flags: <defaults>
</compile_context>

<pallas_src>
import jax
import jax.numpy as jnp
from jax import lax
from jax.experimental import pallas as pl
from jax.experimental.pallas import tpu as pltpu

EPS = 1e-5
NEG_SLOPE = 0.2


def _conv_block_kernel(x_ref, w_ref, b_ref, o_ref):
    # x_ref: (4, Hp, Wp, Cin) bf16   -- 4 parity planes of the reflect-padded input
    # w_ref: (16, Cin, TCo)   bf16   -- tap-major packed conv weights (Cout tile)
    # b_ref: (1, TCo)         f32
    # o_ref: (1, Ho, Wo, TCo)
    _, Ho, Wo, TCo = o_ref.shape
    Cin = x_ref.shape[-1]

    acc = jnp.zeros((Ho * Wo, TCo), jnp.float32)
    # 16 taps of the 4x4 stride-2 kernel. Tap (ky, kx) with ky=2*by+ry,
    # kx=2*bx+rx reads a contiguous (Ho, Wo) window of parity plane (ry, rx).
    for ry in range(2):
        for rx in range(2):
            plane = x_ref[2 * ry + rx]                 # (Hp, Wp, Cin), one load
            for bx in range(2):
                # Sublane (W) shift hoisted out of the inner (by) loop.
                wshift = plane[:, bx:bx + Wo, :]       # (Hp, Wo, Cin)
                for by in range(2):
                    ky, kx = 2 * by + ry, 2 * bx + rx
                    patch = wshift[by:by + Ho].reshape(Ho * Wo, Cin)   # bf16
                    acc = acc + jnp.dot(                # bf16 x bf16 -> f32 acc
                        patch, w_ref[4 * ky + kx],
                        preferred_element_type=jnp.float32)

    acc = acc + b_ref[0].astype(jnp.float32)            # (Ho*Wo, TCo)

    # Fused InstanceNorm: single stats pass (var = E[x^2] - E[x]^2), then one
    # apply pass that also performs the LeakyReLU and the output store.
    inv_m = 1.0 / float(Ho * Wo)
    s1 = jnp.sum(acc, axis=0, keepdims=True)             # (1, TCo)
    s2 = jnp.sum(acc * acc, axis=0, keepdims=True)       # (1, TCo)
    mean = s1 * inv_m
    var = jnp.maximum(s2 * inv_m - mean * mean, 0.0)
    scale = lax.rsqrt(var + EPS)
    shift = -mean * scale
    y = acc * scale + shift
    y = jnp.maximum(y, NEG_SLOPE * y)                    # LeakyReLU(0.2)
    o_ref[0] = y.reshape(Ho, Wo, TCo).astype(o_ref.dtype)


def conv_block(x_nchw, w, b, *, stride=2):
    """x_nchw: (N, Cin, H, W); w: (Cout, Cin, 4, 4) PyTorch OIHW; b: (Cout,)."""
    N, Cin, H, W = x_nchw.shape
    Cout = w.shape[0]
    assert w.shape == (Cout, Cin, 4, 4)
    assert stride == 2, "kernel specialized to the module default stride=2"
    assert H % 2 == 0 and W % 2 == 0, "reflect-pad parity split needs even H, W"

    Ho = (H + 2 - 4) // 2 + 1            # = H // 2
    Wo = (W + 2 - 4) // 2 + 1            # = W // 2
    Hp, Wp = Ho + 1, Wo + 1              # parity-plane extents of the padded input

    # NCHW -> NHWC, reflect pad by 1, split by (row, col) parity so every conv
    # tap is a contiguous window.  No data duplication (4 quarter-size planes).
    x = jnp.transpose(x_nchw, (0, 2, 3, 1))
    xp = jnp.pad(x, ((0, 0), (1, 1), (1, 1), (0, 0)), mode="reflect")
    planes = jnp.stack(
        [xp[:, ry::2, rx::2, :] for ry in range(2) for rx in range(2)], axis=1)
    planes = planes.reshape(N * 4, Hp, Wp, Cin).astype(jnp.bfloat16)  # bf16 MXU feed

    # OIHW (Cout, Cin, kh, kw) -> (kh*kw, Cin, Cout), bf16 for the MXU.
    wp = jnp.transpose(w, (2, 3, 1, 0)).reshape(16, Cin, Cout).astype(jnp.bfloat16)
    bp = b.reshape(1, Cout).astype(jnp.float32)

    # Tile the output-channel axis: exact for per-channel InstanceNorm, gives a
    # second parallel grid axis (v7x 2-TC) and bounds per-step VMEM at large C.
    co_tile = 128 if (Cout % 128 == 0) else Cout
    n_co = Cout // co_tile
    # TODO(synk): for Cout/Cin < 128 a single im2col matmul (K=16*Cin) or
    # channel padding to 128 would further raise MXU lane utilization.

    out_nhwc = pl.pallas_call(
        _conv_block_kernel,
        out_shape=jax.ShapeDtypeStruct((N, Ho, Wo, Cout), x_nchw.dtype),
        grid_spec=pltpu.PrefetchScalarGridSpec(
            num_scalar_prefetch=0,
            grid=(N, n_co),
            in_specs=[
                pl.BlockSpec((4, Hp, Wp, Cin), lambda n, c: (n, 0, 0, 0)),
                pl.BlockSpec((16, Cin, co_tile), lambda n, c: (0, 0, c)),
                pl.BlockSpec((1, co_tile), lambda n, c: (0, c)),
            ],
            out_specs=pl.BlockSpec((1, Ho, Wo, co_tile), lambda n, c: (n, 0, 0, c)),
        ),
        compiler_params=pltpu.CompilerParams(
            dimension_semantics=("parallel", "parallel"),
            vmem_limit_bytes=48 * 1024 * 1024),
    )(planes, wp, bp)

    return jnp.transpose(out_nhwc, (0, 3, 1, 2))          # NHWC -> NCHW


# --------- pure-JAX reference (correctness check only) ---------
def _ref_conv_block(x, w, b):
    xp = jnp.pad(x, ((0, 0), (0, 0), (1, 1), (1, 1)), mode="reflect")
    y = lax.conv_general_dilated(
        xp, w, window_strides=(2, 2), padding="VALID",
        dimension_numbers=("NCHW", "OIHW", "NCHW"))
    y = y + b[None, :, None, None]
    mean = jnp.mean(y, axis=(2, 3), keepdims=True)
    var = jnp.mean((y - mean) ** 2, axis=(2, 3), keepdims=True)
    y = (y - mean) * lax.rsqrt(var + EPS)
    return jnp.where(y >= 0, y, NEG_SLOPE * y)


if __name__ == "__main__":
    key = jax.random.PRNGKey(0)
    N, Cin, Cout, H, W = 2, 4, 8, 16, 16

    k_x, k_w, k_b = jax.random.split(key, 3)
    x = jax.random.normal(k_x, (N, Cin, H, W), jnp.float32)
    w = jax.random.normal(k_w, (Cout, Cin, 4, 4), jnp.float32) * 0.1
    b = jax.random.normal(k_b, (Cout,), jnp.float32) * 0.1

    out = conv_block(x, w, b)
    out = jax.block_until_ready(out)

    ref = _ref_conv_block(x, w, b)
    assert out.shape == (N, Cout, H // 2, W // 2)
    err = float(jnp.max(jnp.abs(out - ref)))
    # Tolerance accounts for bf16 MXU inputs (f32 accumulation) vs f32 reference.
    assert err < 5e-2, f"max abs err {err}"

    print("KERNEL_OK")
</pallas_src>

<mosaic_0001>
module attributes {stable_mosaic.version = 11 : i64} {
  func.func @_conv_block_kernel(%arg0: i32, %arg1: i32, %arg2: memref<4x9x9x4xbf16, #tpu.memory_space<vmem>>, %arg3: memref<16x4x8xbf16, #tpu.memory_space<vmem>>, %arg4: memref<1x8xf32, #tpu.memory_space<vmem>>, %arg5: memref<1x8x8x8xf32, #tpu.memory_space<vmem>>) attributes {dimension_semantics = [#tpu.dimension_semantics<parallel>, #tpu.dimension_semantics<parallel>], iteration_bounds = array<i64: 2, 1>, scalar_prefetch = 0 : i64, scratch_operands = 0 : i64, tpu.core_type = #tpu.core_type<tc>, window_params = [{transform_indices = @transform_0, window_bounds = array<i64: 4, 9, 9, 4>}, {transform_indices = @transform_1, window_bounds = array<i64: 16, 4, 8>}, {transform_indices = @transform_2, window_bounds = array<i64: 1, 8>}, {transform_indices = @transform_3, window_bounds = array<i64: 1, 8, 8, 8>}]} {
    %cst = arith.constant 0.000000e+00 : f32
    %0 = vector.broadcast %cst : f32 to vector<64x8xf32>
    %c0 = arith.constant 0 : index
    %c0_0 = arith.constant 0 : index
    %c0_1 = arith.constant 0 : index
    %c0_2 = arith.constant 0 : index
    %1 = vector.load %arg2[%c0, %c0_0, %c0_1, %c0_2] : memref<4x9x9x4xbf16, #tpu.memory_space<vmem>>, vector<1x9x9x4xbf16>
    %2 = vector.shape_cast %1 : vector<1x9x9x4xbf16> to vector<9x9x4xbf16>
    %3 = vector.extract_strided_slice %2 {offsets = [0, 0, 0], sizes = [9, 8, 4], strides = [1, 1, 1]} : vector<9x9x4xbf16> to vector<9x8x4xbf16>
    %4 = vector.extract_strided_slice %3 {offsets = [0, 0, 0], sizes = [8, 8, 4], strides = [1, 1, 1]} : vector<9x8x4xbf16> to vector<8x8x4xbf16>
    %5 = vector.shape_cast %4 : vector<8x8x4xbf16> to vector<64x4xbf16>
    %c0_3 = arith.constant 0 : index
    %c0_4 = arith.constant 0 : index
    %c0_5 = arith.constant 0 : index
    %6 = vector.load %arg3[%c0_3, %c0_4, %c0_5] : memref<16x4x8xbf16, #tpu.memory_space<vmem>>, vector<1x4x8xbf16>
    %7 = vector.shape_cast %6 : vector<1x4x8xbf16> to vector<4x8xbf16>
    %cst_6 = arith.constant dense<0.000000e+00> : vector<64x8xf32>
    %8 = tpu.matmul %5, %7, %cst_6 {dimension_numbers = #tpu.dot_dimension_numbers<[1], [0], [0], [1], [0, 0, 1, 1], [], []>} : vector<64x4xbf16>, vector<4x8xbf16>, vector<64x8xf32> -> vector<64x8xf32>
    %9 = arith.addf %0, %8 : vector<64x8xf32>
    %10 = vector.extract_strided_slice %3 {offsets = [1, 0, 0], sizes = [8, 8, 4], strides = [1, 1, 1]} : vector<9x8x4xbf16> to vector<8x8x4xbf16>
    %11 = vector.shape_cast %10 : vector<8x8x4xbf16> to vector<64x4xbf16>
    %c8 = arith.constant 8 : index
    %c0_7 = arith.constant 0 : index
    %c0_8 = arith.constant 0 : index
    %12 = vector.load %arg3[%c8, %c0_7, %c0_8] : memref<16x4x8xbf16, #tpu.memory_space<vmem>>, vector<1x4x8xbf16>
    %13 = vector.shape_cast %12 : vector<1x4x8xbf16> to vector<4x8xbf16>
    %cst_9 = arith.constant dense<0.000000e+00> : vector<64x8xf32>
    %14 = tpu.matmul %11, %13, %cst_9 {dimension_numbers = #tpu.dot_dimension_numbers<[1], [0], [0], [1], [0, 0, 1, 1], [], []>} : vector<64x4xbf16>, vector<4x8xbf16>, vector<64x8xf32> -> vector<64x8xf32>
    %15 = arith.addf %9, %14 : vector<64x8xf32>
    %16 = vector.extract_strided_slice %2 {offsets = [0, 1, 0], sizes = [9, 8, 4], strides = [1, 1, 1]} : vector<9x9x4xbf16> to vector<9x8x4xbf16>
    %17 = vector.extract_strided_slice %16 {offsets = [0, 0, 0], sizes = [8, 8, 4], strides = [1, 1, 1]} : vector<9x8x4xbf16> to vector<8x8x4xbf16>
    %18 = vector.shape_cast %17 : vector<8x8x4xbf16> to vector<64x4xbf16>
    %c2 = arith.constant 2 : index
    %c0_10 = arith.constant 0 : index
    %c0_11 = arith.constant 0 : index
    %19 = vector.load %arg3[%c2, %c0_10, %c0_11] : memref<16x4x8xbf16, #tpu.memory_space<vmem>>, vector<1x4x8xbf16>
    %20 = vector.shape_cast %19 : vector<1x4x8xbf16> to vector<4x8xbf16>
    %cst_12 = arith.constant dense<0.000000e+00> : vector<64x8xf32>
    %21 = tpu.matmul %18, %20, %cst_12 {dimension_numbers = #tpu.dot_dimension_numbers<[1], [0], [0], [1], [0, 0, 1, 1], [], []>} : vector<64x4xbf16>, vector<4x8xbf16>, vector<64x8xf32> -> vector<64x8xf32>
    %22 = arith.addf %15, %21 : vector<64x8xf32>
    %23 = vector.extract_strided_slice %16 {offsets = [1, 0, 0], sizes = [8, 8, 4], strides = [1, 1, 1]} : vector<9x8x4xbf16> to vector<8x8x4xbf16>
    %24 = vector.shape_cast %23 : vector<8x8x4xbf16> to vector<64x4xbf16>
    %c10 = arith.constant 10 : index
    %c0_13 = arith.constant 0 : index
    %c0_14 = arith.constant 0 : index
    %25 = vector.load %arg3[%c10, %c0_13, %c0_14] : memref<16x4x8xbf16, #tpu.memory_space<vmem>>, vector<1x4x8xbf16>
    %26 = vector.shape_cast %25 : vector<1x4x8xbf16> to vector<4x8xbf16>
    %cst_15 = arith.constant dense<0.000000e+00> : vector<64x8xf32>
    %27 = tpu.matmul %24, %26, %cst_15 {dimension_numbers = #tpu.dot_dimension_numbers<[1], [0], [0], [1], [0, 0, 1, 1], [], []>} : vector<64x4xbf16>, vector<4x8xbf16>, vector<64x8xf32> -> vector<64x8xf32>
    %28 = arith.addf %22, %27 : vector<64x8xf32>
    %c1 = arith.constant 1 : index
    %c0_16 = arith.constant 0 : index
    %c0_17 = arith.constant 0 : index
    %c0_18 = arith.constant 0 : index
    %29 = vector.load %arg2[%c1, %c0_16, %c0_17, %c0_18] : memref<4x9x9x4xbf16, #tpu.memory_space<vmem>>, vector<1x9x9x4xbf16>
    %30 = vector.shape_cast %29 : vector<1x9x9x4xbf16> to vector<9x9x4xbf16>
    %31 = vector.extract_strided_slice %30 {offsets = [0, 0, 0], sizes = [9, 8, 4], strides = [1, 1, 1]} : vector<9x9x4xbf16> to vector<9x8x4xbf16>
    %32 = vector.extract_strided_slice %31 {offsets = [0, 0, 0], sizes = [8, 8, 4], strides = [1, 1, 1]} : vector<9x8x4xbf16> to vector<8x8x4xbf16>
    %33 = vector.shape_cast %32 : vector<8x8x4xbf16> to vector<64x4xbf16>
    %c1_19 = arith.constant 1 : index
    %c0_20 = arith.constant 0 : index
    %c0_21 = arith.constant 0 : index
    %34 = vector.load %arg3[%c1_19, %c0_20, %c0_21] : memref<16x4x8xbf16, #tpu.memory_space<vmem>>, vector<1x4x8xbf16>
    %35 = vector.shape_cast %34 : vector<1x4x8xbf16> to vector<4x8xbf16>
    %cst_22 = arith.constant dense<0.000000e+00> : vector<64x8xf32>
    %36 = tpu.matmul %33, %35, %cst_22 {dimension_numbers = #tpu.dot_dimension_numbers<[1], [0], [0], [1], [0, 0, 1, 1], [], []>} : vector<64x4xbf16>, vector<4x8xbf16>, vector<64x8xf32> -> vector<64x8xf32>
    %37 = arith.addf %28, %36 : vector<64x8xf32>
    %38 = vector.extract_strided_slice %31 {offsets = [1, 0, 0], sizes = [8, 8, 4], strides = [1, 1, 1]} : vector<9x8x4xbf16> to vector<8x8x4xbf16>
    %39 = vector.shape_cast %38 : vector<8x8x4xbf16> to vector<64x4xbf16>
    %c9 = arith.constant 9 : index
    %c0_23 = arith.constant 0 : index
    %c0_24 = arith.constant 0 : index
    %40 = vector.load %arg3[%c9, %c0_23, %c0_24] : memref<16x4x8xbf16, #tpu.memory_space<vmem>>, vector<1x4x8xbf16>
    %41 = vector.shape_cast %40 : vector<1x4x8xbf16> to vector<4x8xbf16>
    %cst_25 = arith.constant dense<0.000000e+00> : vector<64x8xf32>
    %42 = tpu.matmul %39, %41, %cst_25 {dimension_numbers = #tpu.dot_dimension_numbers<[1], [0], [0], [1], [0, 0, 1, 1], [], []>} : vector<64x4xbf16>, vector<4x8xbf16>, vector<64x8xf32> -> vector<64x8xf32>
    %43 = arith.addf %37, %42 : vector<64x8xf32>
    %44 = vector.extract_strided_slice %30 {offsets = [0, 1, 0], sizes = [9, 8, 4], strides = [1, 1, 1]} : vector<9x9x4xbf16> to vector<9x8x4xbf16>
    %45 = vector.extract_strided_slice %44 {offsets = [0, 0, 0], sizes = [8, 8, 4], strides = [1, 1, 1]} : vector<9x8x4xbf16> to vector<8x8x4xbf16>
    %46 = vector.shape_cast %45 : vector<8x8x4xbf16> to vector<64x4xbf16>
    %c3 = arith.constant 3 : index
    %c0_26 = arith.constant 0 : index
    %c0_27 = arith.constant 0 : index
    %47 = vector.load %arg3[%c3, %c0_26, %c0_27] : memref<16x4x8xbf16, #tpu.memory_space<vmem>>, vector<1x4x8xbf16>
    %48 = vector.shape_cast %47 : vector<1x4x8xbf16> to vector<4x8xbf16>
    %cst_28 = arith.constant dense<0.000000e+00> : vector<64x8xf32>
    %49 = tpu.matmul %46, %48, %cst_28 {dimension_numbers = #tpu.dot_dimension_numbers<[1], [0], [0], [1], [0, 0, 1, 1], [], []>} : vector<64x4xbf16>, vector<4x8xbf16>, vector<64x8xf32> -> vector<64x8xf32>
    %50 = arith.addf %43, %49 : vector<64x8xf32>
    %51 = vector.extract_strided_slice %44 {offsets = [1, 0, 0], sizes = [8, 8, 4], strides = [1, 1, 1]} : vector<9x8x4xbf16> to vector<8x8x4xbf16>
    %52 = vector.shape_cast %51 : vector<8x8x4xbf16> to vector<64x4xbf16>
    %c11 = arith.constant 11 : index
    %c0_29 = arith.constant 0 : index
    %c0_30 = arith.constant 0 : index
    %53 = vector.load %arg3[%c11, %c0_29, %c0_30] : memref<16x4x8xbf16, #tpu.memory_space<vmem>>, vector<1x4x8xbf16>
    %54 = vector.shape_cast %53 : vector<1x4x8xbf16> to vector<4x8xbf16>
    %cst_31 = arith.constant dense<0.000000e+00> : vector<64x8xf32>
    %55 = tpu.matmul %52, %54, %cst_31 {dimension_numbers = #tpu.dot_dimension_numbers<[1], [0], [0], [1], [0, 0, 1, 1], [], []>} : vector<64x4xbf16>, vector<4x8xbf16>, vector<64x8xf32> -> vector<64x8xf32>
    %56 = arith.addf %50, %55 : vector<64x8xf32>
    %c2_32 = arith.constant 2 : index
    %c0_33 = arith.constant 0 : index
    %c0_34 = arith.constant 0 : index
    %c0_35 = arith.constant 0 : index
    %57 = vector.load %arg2[%c2_32, %c0_33, %c0_34, %c0_35] : memref<4x9x9x4xbf16, #tpu.memory_space<vmem>>, vector<1x9x9x4xbf16>
    %58 = vector.shape_cast %57 : vector<1x9x9x4xbf16> to vector<9x9x4xbf16>
    %59 = vector.extract_strided_slice %58 {offsets = [0, 0, 0], sizes = [9, 8, 4], strides = [1, 1, 1]} : vector<9x9x4xbf16> to vector<9x8x4xbf16>
    %60 = vector.extract_strided_slice %59 {offsets = [0, 0, 0], sizes = [8, 8, 4], strides = [1, 1, 1]} : vector<9x8x4xbf16> to vector<8x8x4xbf16>
    %61 = vector.shape_cast %60 : vector<8x8x4xbf16> to vector<64x4xbf16>
    %c4 = arith.constant 4 : index
    %c0_36 = arith.constant 0 : index
    %c0_37 = arith.constant 0 : index
    %62 = vector.load %arg3[%c4, %c0_36, %c0_37] : memref<16x4x8xbf16, #tpu.memory_space<vmem>>, vector<1x4x8xbf16>
    %63 = vector.shape_cast %62 : vector<1x4x8xbf16> to vector<4x8xbf16>
    %cst_38 = arith.constant dense<0.000000e+00> : vector<64x8xf32>
    %64 = tpu.matmul %61, %63, %cst_38 {dimension_numbers = #tpu.dot_dimension_numbers<[1], [0], [0], [1], [0, 0, 1, 1], [], []>} : vector<64x4xbf16>, vector<4x8xbf16>, vector<64x8xf32> -> vector<64x8xf32>
    %65 = arith.addf %56, %64 : vector<64x8xf32>
    %66 = vector.extract_strided_slice %59 {offsets = [1, 0, 0], sizes = [8, 8, 4], strides = [1, 1, 1]} : vector<9x8x4xbf16> to vector<8x8x4xbf16>
    %67 = vector.shape_cast %66 : vector<8x8x4xbf16> to vector<64x4xbf16>
    %c12 = arith.constant 12 : index
    %c0_39 = arith.constant 0 : index
    %c0_40 = arith.constant 0 : index
    %68 = vector.load %arg3[%c12, %c0_39, %c0_40] : memref<16x4x8xbf16, #tpu.memory_space<vmem>>, vector<1x4x8xbf16>
    %69 = vector.shape_cast %68 : vector<1x4x8xbf16> to vector<4x8xbf16>
    %cst_41 = arith.constant dense<0.000000e+00> : vector<64x8xf32>
    %70 = tpu.matmul %67, %69, %cst_41 {dimension_numbers = #tpu.dot_dimension_numbers<[1], [0], [0], [1], [0, 0, 1, 1], [], []>} : vector<64x4xbf16>, vector<4x8xbf16>, vector<64x8xf32> -> vector<64x8xf32>
    %71 = arith.addf %65, %70 : vector<64x8xf32>
    %72 = vector.extract_strided_slice %58 {offsets = [0, 1, 0], sizes = [9, 8, 4], strides = [1, 1, 1]} : vector<9x9x4xbf16> to vector<9x8x4xbf16>
    %73 = vector.extract_strided_slice %72 {offsets = [0, 0, 0], sizes = [8, 8, 4], strides = [1, 1, 1]} : vector<9x8x4xbf16> to vector<8x8x4xbf16>
    %74 = vector.shape_cast %73 : vector<8x8x4xbf16> to vector<64x4xbf16>
    %c6 = arith.constant 6 : index
    %c0_42 = arith.constant 0 : index
    %c0_43 = arith.constant 0 : index
    %75 = vector.load %arg3[%c6, %c0_42, %c0_43] : memref<16x4x8xbf16, #tpu.memory_space<vmem>>, vector<1x4x8xbf16>
    %76 = vector.shape_cast %75 : vector<1x4x8xbf16> to vector<4x8xbf16>
    %cst_44 = arith.constant dense<0.000000e+00> : vector<64x8xf32>
    %77 = tpu.matmul %74, %76, %cst_44 {dimension_numbers = #tpu.dot_dimension_numbers<[1], [0], [0], [1], [0, 0, 1, 1], [], []>} : vector<64x4xbf16>, vector<4x8xbf16>, vector<64x8xf32> -> vector<64x8xf32>
    %78 = arith.addf %71, %77 : vector<64x8xf32>
    %79 = vector.extract_strided_slice %72 {offsets = [1, 0, 0], sizes = [8, 8, 4], strides = [1, 1, 1]} : vector<9x8x4xbf16> to vector<8x8x4xbf16>
    %80 = vector.shape_cast %79 : vector<8x8x4xbf16> to vector<64x4xbf16>
    %c14 = arith.constant 14 : index
    %c0_45 = arith.constant 0 : index
    %c0_46 = arith.constant 0 : index
    %81 = vector.load %arg3[%c14, %c0_45, %c0_46] : memref<16x4x8xbf16, #tpu.memory_space<vmem>>, vector<1x4x8xbf16>
    %82 = vector.shape_cast %81 : vector<1x4x8xbf16> to vector<4x8xbf16>
    %cst_47 = arith.constant dense<0.000000e+00> : vector<64x8xf32>
    %83 = tpu.matmul %80, %82, %cst_47 {dimension_numbers = #tpu.dot_dimension_numbers<[1], [0], [0], [1], [0, 0, 1, 1], [], []>} : vector<64x4xbf16>, vector<4x8xbf16>, vector<64x8xf32> -> vector<64x8xf32>
    %84 = arith.addf %78, %83 : vector<64x8xf32>
    %c3_48 = arith.constant 3 : index
    %c0_49 = arith.constant 0 : index
    %c0_50 = arith.constant 0 : index
    %c0_51 = arith.constant 0 : index
    %85 = vector.load %arg2[%c3_48, %c0_49, %c0_50, %c0_51] : memref<4x9x9x4xbf16, #tpu.memory_space<vmem>>, vector<1x9x9x4xbf16>
    %86 = vector.shape_cast %85 : vector<1x9x9x4xbf16> to vector<9x9x4xbf16>
    %87 = vector.extract_strided_slice %86 {offsets = [0, 0, 0], sizes = [9, 8, 4], strides = [1, 1, 1]} : vector<9x9x4xbf16> to vector<9x8x4xbf16>
    %88 = vector.extract_strided_slice %87 {offsets = [0, 0, 0], sizes = [8, 8, 4], strides = [1, 1, 1]} : vector<9x8x4xbf16> to vector<8x8x4xbf16>
    %89 = vector.shape_cast %88 : vector<8x8x4xbf16> to vector<64x4xbf16>
    %c5 = arith.constant 5 : index
    %c0_52 = arith.constant 0 : index
    %c0_53 = arith.constant 0 : index
    %90 = vector.load %arg3[%c5, %c0_52, %c0_53] : memref<16x4x8xbf16, #tpu.memory_space<vmem>>, vector<1x4x8xbf16>
    %91 = vector.shape_cast %90 : vector<1x4x8xbf16> to vector<4x8xbf16>
    %cst_54 = arith.constant dense<0.000000e+00> : vector<64x8xf32>
    %92 = tpu.matmul %89, %91, %cst_54 {dimension_numbers = #tpu.dot_dimension_numbers<[1], [0], [0], [1], [0, 0, 1, 1], [], []>} : vector<64x4xbf16>, vector<4x8xbf16>, vector<64x8xf32> -> vector<64x8xf32>
    %93 = arith.addf %84, %92 : vector<64x8xf32>
    %94 = vector.extract_strided_slice %87 {offsets = [1, 0, 0], sizes = [8, 8, 4], strides = [1, 1, 1]} : vector<9x8x4xbf16> to vector<8x8x4xbf16>
    %95 = vector.shape_cast %94 : vector<8x8x4xbf16> to vector<64x4xbf16>
    %c13 = arith.constant 13 : index
    %c0_55 = arith.constant 0 : index
    %c0_56 = arith.constant 0 : index
    %96 = vector.load %arg3[%c13, %c0_55, %c0_56] : memref<16x4x8xbf16, #tpu.memory_space<vmem>>, vector<1x4x8xbf16>
    %97 = vector.shape_cast %96 : vector<1x4x8xbf16> to vector<4x8xbf16>
    %cst_57 = arith.constant dense<0.000000e+00> : vector<64x8xf32>
    %98 = tpu.matmul %95, %97, %cst_57 {dimension_numbers = #tpu.dot_dimension_numbers<[1], [0], [0], [1], [0, 0, 1, 1], [], []>} : vector<64x4xbf16>, vector<4x8xbf16>, vector<64x8xf32> -> vector<64x8xf32>
    %99 = arith.addf %93, %98 : vector<64x8xf32>
    %100 = vector.extract_strided_slice %86 {offsets = [0, 1, 0], sizes = [9, 8, 4], strides = [1, 1, 1]} : vector<9x9x4xbf16> to vector<9x8x4xbf16>
    %101 = vector.extract_strided_slice %100 {offsets = [0, 0, 0], sizes = [8, 8, 4], strides = [1, 1, 1]} : vector<9x8x4xbf16> to vector<8x8x4xbf16>
    %102 = vector.shape_cast %101 : vector<8x8x4xbf16> to vector<64x4xbf16>
    %c7 = arith.constant 7 : index
    %c0_58 = arith.constant 0 : index
    %c0_59 = arith.constant 0 : index
    %103 = vector.load %arg3[%c7, %c0_58, %c0_59] : memref<16x4x8xbf16, #tpu.memory_space<vmem>>, vector<1x4x8xbf16>
    %104 = vector.shape_cast %103 : vector<1x4x8xbf16> to vector<4x8xbf16>
    %cst_60 = arith.constant dense<0.000000e+00> : vector<64x8xf32>
    %105 = tpu.matmul %102, %104, %cst_60 {dimension_numbers = #tpu.dot_dimension_numbers<[1], [0], [0], [1], [0, 0, 1, 1], [], []>} : vector<64x4xbf16>, vector<4x8xbf16>, vector<64x8xf32> -> vector<64x8xf32>
    %106 = arith.addf %99, %105 : vector<64x8xf32>
    %107 = vector.extract_strided_slice %100 {offsets = [1, 0, 0], sizes = [8, 8, 4], strides = [1, 1, 1]} : vector<9x8x4xbf16> to vector<8x8x4xbf16>
    %108 = vector.shape_cast %107 : vector<8x8x4xbf16> to vector<64x4xbf16>
    %c15 = arith.constant 15 : index
    %c0_61 = arith.constant 0 : index
    %c0_62 = arith.constant 0 : index
    %109 = vector.load %arg3[%c15, %c0_61, %c0_62] : memref<16x4x8xbf16, #tpu.memory_space<vmem>>, vector<1x4x8xbf16>
    %110 = vector.shape_cast %109 : vector<1x4x8xbf16> to vector<4x8xbf16>
    %cst_63 = arith.constant dense<0.000000e+00> : vector<64x8xf32>
    %111 = tpu.matmul %108, %110, %cst_63 {dimension_numbers = #tpu.dot_dimension_numbers<[1], [0], [0], [1], [0, 0, 1, 1], [], []>} : vector<64x4xbf16>, vector<4x8xbf16>, vector<64x8xf32> -> vector<64x8xf32>
    %112 = arith.addf %106, %111 : vector<64x8xf32>
    %c0_64 = arith.constant 0 : index
    %c0_65 = arith.constant 0 : index
    %113 = vector.load %arg4[%c0_64, %c0_65] : memref<1x8xf32, #tpu.memory_space<vmem>>, vector<1x8xf32>
    %114 = vector.shape_cast %113 : vector<1x8xf32> to vector<8xf32>
    %115 = vector.shape_cast %114 : vector<8xf32> to vector<1x8xf32>
    %116 = vector.broadcast %115 : vector<1x8xf32> to vector<64x8xf32>
    %117 = arith.addf %112, %116 : vector<64x8xf32>
    %cst_66 = arith.constant dense<0.000000e+00> : vector<8xf32>
    %118 = vector.multi_reduction <add>, %117, %cst_66 [0] : vector<64x8xf32> to vector<8xf32>
    %119 = vector.shape_cast %118 : vector<8xf32> to vector<1x8xf32>
    %120 = arith.mulf %117, %117 : vector<64x8xf32>
    %cst_67 = arith.constant dense<0.000000e+00> : vector<8xf32>
    %121 = vector.multi_reduction <add>, %120, %cst_67 [0] : vector<64x8xf32> to vector<8xf32>
    %122 = vector.shape_cast %121 : vector<8xf32> to vector<1x8xf32>
    %cst_68 = arith.constant 1.562500e-02 : f32
    %123 = vector.broadcast %cst_68 : f32 to vector<1x8xf32>
    %124 = arith.mulf %119, %123 : vector<1x8xf32>
    %cst_69 = arith.constant 1.562500e-02 : f32
    %125 = vector.broadcast %cst_69 : f32 to vector<1x8xf32>
    %126 = arith.mulf %122, %125 : vector<1x8xf32>
    %127 = arith.mulf %124, %124 : vector<1x8xf32>
    %128 = arith.subf %126, %127 : vector<1x8xf32>
    %cst_70 = arith.constant 0.000000e+00 : f32
    %129 = vector.broadcast %cst_70 : f32 to vector<1x8xf32>
    %130 = arith.maximumf %128, %129 : vector<1x8xf32>
    %cst_71 = arith.constant 9.99999974E-6 : f32
    %131 = vector.broadcast %cst_71 : f32 to vector<1x8xf32>
    %132 = arith.addf %130, %131 : vector<1x8xf32>
    %133 = math.rsqrt %132 : vector<1x8xf32>
    %cst_72 = arith.constant 0.000000e+00 : f32
    %134 = vector.broadcast %cst_72 : f32 to vector<1x8xf32>
    %135 = arith.subf %134, %124 : vector<1x8xf32>
    %136 = arith.mulf %135, %133 : vector<1x8xf32>
    %137 = vector.broadcast %133 : vector<1x8xf32> to vector<64x8xf32>
    %138 = arith.mulf %117, %137 : vector<64x8xf32>
    %139 = vector.broadcast %136 : vector<1x8xf32> to vector<64x8xf32>
    %140 = arith.addf %138, %139 : vector<64x8xf32>
    %cst_73 = arith.constant 2.000000e-01 : f32
    %141 = vector.broadcast %cst_73 : f32 to vector<64x8xf32>
    %142 = arith.mulf %141, %140 : vector<64x8xf32>
    %143 = arith.maximumf %140, %142 : vector<64x8xf32>
    %144 = vector.shape_cast %143 : vector<64x8xf32> to vector<8x8x8xf32>
    %c0_74 = arith.constant 0 : index
    %c0_75 = arith.constant 0 : index
    %c0_76 = arith.constant 0 : index
    %c0_77 = arith.constant 0 : index
    %145 = vector.load %arg5[%c0_74, %c0_75, %c0_76, %c0_77] : memref<1x8x8x8xf32, #tpu.memory_space<vmem>>, vector<1x8x8x8xf32>
    %146 = vector.shape_cast %145 : vector<1x8x8x8xf32> to vector<8x8x8xf32>
    %147 = vector.shape_cast %144 : vector<8x8x8xf32> to vector<1x8x8x8xf32>
    tpu.vector_store %arg5[%c0_74, %c0_75, %c0_76, %c0_77], %147 {strides = array<i32>} : memref<1x8x8x8xf32, #tpu.memory_space<vmem>>, vector<1x8x8x8xf32>,
    return
  }
  func.func @transform_0(%arg0: i32, %arg1: i32) -> (i32, i32, i32, i32) {
    %c0_i32 = arith.constant 0 : i32
    %c0_i32_0 = arith.constant 0 : i32
    %c0_i32_1 = arith.constant 0 : i32
    %c0_i32_2 = arith.constant 0 : i32
    return %arg0, %c0_i32, %c0_i32_0, %c0_i32_1 : i32, i32, i32, i32
  }
  func.func @transform_1(%arg0: i32, %arg1: i32) -> (i32, i32, i32) {
    %c0_i32 = arith.constant 0 : i32
    %c0_i32_0 = arith.constant 0 : i32
    %c0_i32_1 = arith.constant 0 : i32
    return %c0_i32, %c0_i32_0, %arg1 : i32, i32, i32
  }
  func.func @transform_2(%arg0: i32, %arg1: i32) -> (i32, i32) {
    %c0_i32 = arith.constant 0 : i32
    %c0_i32_0 = arith.constant 0 : i32
    return %c0_i32, %arg1 : i32, i32
  }
  func.func @transform_3(%arg0: i32, %arg1: i32) -> (i32, i32, i32, i32) {
    %c0_i32 = arith.constant 0 : i32
    %c0_i32_0 = arith.constant 0 : i32
    %c0_i32_1 = arith.constant 0 : i32
    return %arg0, %c0_i32, %c0_i32_0, %arg1 : i32, i32, i32, i32
  }
}

</mosaic_0001>

<llo_original>
// kernel: tpu_custom_call.1
$region0: #{tpu_custom_call.1}
  #allocation0 [shape = 'u32[]', space=smem, size = 0x4, offset = 0x4, fixed_abs, tag = 'smem constant byte address 0x4 - core index']
  #allocation1 [shape = 'u32[144,128]{1,0:T(1,128)}', space=vmem, size = 0x12000, scoped, tag = 'internal scratch']
  %s0 = inlined_call_operand.vmem [shape: bf16[8,9,9,4], index: 0, kind: input, shape index: {}]
  %s1 = inlined_call_operand.vmem [shape: bf16[16,4,8], index: 1, kind: input, shape index: {}]
  %s2 = inlined_call_operand.vmem [shape: f32[1,8], index: 2, kind: input, shape index: {}]
  %s3 = inlined_call_operand.hbm [shape: f32[2,8,8,8], index: 3, kind: output, shape index: {}]
  %s4 = sld [smem:[#allocation0]]
  $region45: #{tpu_custom_call.1} parent=0
    _
  %s6 = ssub.s32 1, %s4
  %s7 = scalar_select 0, %s6, %s4
  $region1: #{tpu_custom_call.1} parent=0
    #allocation2 [shape = 'u8[65536]{0}', space=vmem, size = 0x10000, scoped, tag = 'output window, operand 0']
    #allocation3 [shape = 's32[2]{0}', space=sflag, size = 0x8, scoped, tag = 'scoped memory for tpu_custom_call.1']
    %8 = vsyncpa [#allocation3], 0
    %s9 = scalar_lea.sflag [#allocation3], 1
    %10 = vsyncpa %s9, 0
    loop: start=0, step=1, limit=4
    $region2: #{tpu_custom_call.1} parent=1 // loop_pre_header
      _
    $region3: #{tpu_custom_call.1} parent=1 // loop_header
      %s12 = sphi 0, %s16
      %p13 = scmp.ge.s32.totalorder %s12, 4
      %s19 = sphi 0, %s31
      %s20 = sphi 0, %s27
      %s21 = sphi 0, %s19
      %s22 = sphi 0, %s20
      %s23 = sphi 0, %s21
      %s24 = sphi 0, %s22
      %s34 = sphi 0, %s36
      %s37 = sphi 0, %s34
      %s38 = sphi 0, %s37
      %s54 = sphi 0, %s38
      %s60 = sphi 0, %s62
      %s63 = sphi 0, %s60
      %s64 = sphi 0, %s63
      %s80 = sphi 0, %s64
      %s86 = sphi 0, %s88
      %s89 = sphi 0, %s86
      %s90 = sphi 0, %s89
      %s106 = sphi 0, %s90
      %s114 = sphi 0, %s116
      %s117 = sphi 0, %s114
      %s118 = sphi 0, %s117
      %s134 = sphi 0, %s118
    $region4: #{tpu_custom_call.1} parent=1 // loop_header_branch
      %15 = sbr.rel (%p13) target = $region8
    $region5: #{tpu_custom_call.1} parent=1 // loop_body
      %s17 = ssub.s32 %s12, 1
      %s18 = ssub.s32 %s12, 2
      %s25 = sadd.s32 1, %s20
      %p26 = scmp.ge.s32.totalorder %s25, 1
      %s27 = scalar_select %p26, 0, %s25
      %s28 = sadd.s32 1, %s19
      %s29 = scalar_select %p26, %s28, %s19
      %p30 = scmp.ge.s32.totalorder %s29, 2
      %s31 = scalar_select %p30, 0, %s29
      %s32 = ssub.s32 %s19, %s31
      %p33 = scmp.eq.s32.totalorder %s32, 0
      %s35 = sadd.s32 %s34, 1
      %s36 = scalar_select %p33, %s34, %s35
      %p39 = pneg %p33
      %p40 = scmp.eq.s32.totalorder %s12, 1
      %p41 = por %p39, %p40
      %p42 = scmp.ne.s32.totalorder %s34, %s37
      %p43 = scmp.eq.s32.totalorder %s12, 0
      %p44 = por %p42, %p43
      %p45 = scmp.ne.s32.totalorder %s34, %s37
      %p46 = scmp.eq.s32.totalorder %s17, 1
      %p47 = por %p45, %p46
      %p48 = scmp.ne.s32.totalorder %s37, %s38
      %p49 = scmp.eq.s32.totalorder %s17, 0
      %p50 = por %p48, %p49
      %p51 = scmp.ne.s32.totalorder %s37, %s38
      %p52 = scmp.eq.s32.totalorder %s18, 1
      %p53 = por %p51, %p52
      %p55 = scmp.ne.s32.totalorder %s38, %s54
      %p56 = scmp.eq.s32.totalorder %s18, 0
      %p57 = por %p55, %p56
      %s58 = ssub.s32 %s20, %s27
      %p59 = scmp.eq.s32.totalorder %s58, 0
      %s61 = sadd.s32 %s60, 1
      %s62 = scalar_select %p59, %s60, %s61
      %p65 = pneg %p59
      %p66 = scmp.eq.s32.totalorder %s12, 1
      %p67 = por %p65, %p66
      %p68 = scmp.ne.s32.totalorder %s60, %s63
      %p69 = scmp.eq.s32.totalorder %s12, 0
      %p70 = por %p68, %p69
      %p71 = scmp.ne.s32.totalorder %s60, %s63
      %p72 = scmp.eq.s32.totalorder %s17, 1
      %p73 = por %p71, %p72
      %p74 = scmp.ne.s32.totalorder %s63, %s64
      %p75 = scmp.eq.s32.totalorder %s17, 0
      %p76 = por %p74, %p75
      %p77 = scmp.ne.s32.totalorder %s63, %s64
      %p78 = scmp.eq.s32.totalorder %s18, 1
      %p79 = por %p77, %p78
      %p81 = scmp.ne.s32.totalorder %s64, %s80
      %p82 = scmp.eq.s32.totalorder %s18, 0
      %p83 = por %p81, %p82
      %s84 = ssub.s32 %s20, %s27
      %p85 = scmp.eq.s32.totalorder %s84, 0
      %s87 = sadd.s32 %s86, 1
      %s88 = scalar_select %p85, %s86, %s87
      %p91 = pneg %p85
      %p92 = scmp.eq.s32.totalorder %s12, 1
      %p93 = por %p91, %p92
      %p94 = scmp.ne.s32.totalorder %s86, %s89
      %p95 = scmp.eq.s32.totalorder %s12, 0
      %p96 = por %p94, %p95
      %p97 = scmp.ne.s32.totalorder %s86, %s89
      %p98 = scmp.eq.s32.totalorder %s17, 1
      %p99 = por %p97, %p98
      %p100 = scmp.ne.s32.totalorder %s89, %s90
      %p101 = scmp.eq.s32.totalorder %s17, 0
      %p102 = por %p100, %p101
      %p103 = scmp.ne.s32.totalorder %s89, %s90
      %p104 = scmp.eq.s32.totalorder %s18, 1
      %p105 = por %p103, %p104
      %p107 = scmp.ne.s32.totalorder %s90, %s106
      %p108 = scmp.eq.s32.totalorder %s18, 0
      %p109 = por %p107, %p108
      %s110 = ssub.s32 %s19, %s31
      %s111 = ssub.s32 %s20, %s27
      %s112 = sor.u32 %s110, %s111
      %p113 = scmp.eq.s32.totalorder %s112, 0
      %s115 = sadd.s32 %s114, 1
      %s116 = scalar_select %p113, %s114, %s115
      %p119 = pneg %p113
      %p120 = scmp.eq.s32.totalorder %s12, 1
      %p121 = por %p119, %p120
      %p122 = scmp.ne.s32.totalorder %s114, %s117
      %p123 = scmp.eq.s32.totalorder %s12, 0
      %p124 = por %p122, %p123
      %p125 = scmp.ne.s32.totalorder %s114, %s117
      %p126 = scmp.eq.s32.totalorder %s17, 1
      %p127 = por %p125, %p126
      %p128 = scmp.ne.s32.totalorder %s117, %s118
      %p129 = scmp.eq.s32.totalorder %s17, 0
      %p130 = por %p128, %p129
      %p131 = scmp.ne.s32.totalorder %s117, %s118
      %p132 = scmp.eq.s32.totalorder %s18, 1
      %p133 = por %p131, %p132
      %p135 = scmp.ne.s32.totalorder %s118, %s134
      %p136 = scmp.eq.s32.totalorder %s18, 0
      %p137 = por %p135, %p136
      %p138 = scmp.le.s32.totalorder 1, %s12
      %p139 = scmp.lt.s32.totalorder %s12, 3
      %p140 = pnand %p138, %p139
      %p141 = pneg %p140
      // Predicated region
      $region9: #{tpu_custom_call.1} parent=5 // pred_check
        _
      $region10: #{tpu_custom_call.1} parent=5 // pred_check_branch
        %143 = sbr.rel (%p140) target = $region12
      $region11: #{tpu_custom_call.1} parent=5 // pred_region
        %s144 = ssub.s32 %s12, 1
        // Predicated region
        $region13: #{tpu_custom_call.1} parent=11 // pred_check
          %p145 = pneg %p76
        $region14: #{tpu_custom_call.1} parent=11 // pred_check_branch
          %147 = sbr.rel (%p145) target = $region16
        $region15: #{tpu_custom_call.1} parent=11 // pred_region
          %p148 = scmp.lt.s32.totalorder %s22, 0
          %s149 = scalar_select %p148, %s22, 0
          %s150 = smul.addr %s149, 2
          %s151 = scalar_lea.vmem %s1, %s150
        $region16: #{tpu_custom_call.1} parent=11 // pred_fallthru
          _
        // Predicated region
        $region17: #{tpu_custom_call.1} parent=11 // pred_check
          %p152 = pneg %p102
        $region18: #{tpu_custom_call.1} parent=11 // pred_check_branch
          %154 = sbr.rel (%p152) target = $region20
        $region19: #{tpu_custom_call.1} parent=11 // pred_region
          %p155 = scmp.lt.s32.totalorder %s22, 0
          %s156 = scalar_select %p155, %s22, 0
          %s157 = scalar_lea.vmem %s2, %s156
        $region20: #{tpu_custom_call.1} parent=11 // pred_fallthru
          _
      $region12: #{tpu_custom_call.1} parent=5 // pred_fallthru
        _
      %p158 = scmp.lt.s32.totalorder %s12, 2
      // Predicated region
      $region21: #{tpu_custom_call.1} parent=5 // pred_check
        %p159 = pneg %p158
      $region22: #{tpu_custom_call.1} parent=5 // pred_check_branch
        %161 = sbr.rel (%p159) target = $region24
      $region23: #{tpu_custom_call.1} parent=5 // pred_region
        // Predicated region
        $region25: #{tpu_custom_call.1} parent=23 // pred_check
          %p162 = pneg %p44
        $region26: #{tpu_custom_call.1} parent=23 // pred_check_branch
          %164 = sbr.rel (%p162) target = $region28
        $region27: #{tpu_custom_call.1} parent=23 // pred_region
          %s165 = smul.u32 4, %s19
          %p166 = scmp.lt.s32.totalorder %s165, 7
          %s167 = scalar_select %p166, %s165, 7
          %s168 = smul.addr %s167, 18
          %s169 = smul.addr %s168, 4
          %s170 = scalar_lea.vmem %s0, %s169
          %s171 = smul.u32 4, %s19
        $region28: #{tpu_custom_call.1} parent=23 // pred_fallthru
          _
      $region24: #{tpu_custom_call.1} parent=5 // pred_fallthru
        _
      %p172 = scmp.le.s32.totalorder 1, %s12
      %p173 = scmp.lt.s32.totalorder %s12, 3
      %p174 = pnand %p172, %p173
      %p175 = pneg %p174
      // Predicated region
      $region29: #{tpu_custom_call.1} parent=5 // pred_check
        _
      $region30: #{tpu_custom_call.1} parent=5 // pred_check_branch
        %177 = sbr.rel (%p174) target = $region32
      $region31: #{tpu_custom_call.1} parent=5 // pred_region
        %s178 = ssub.s32 %s12, 1
        %s179 = smul.u32 4, %s21
        %p180 = scmp.lt.s32.totalorder %s179, 7
        %s181 = scalar_select %p180, %s179, 7
        %s182 = smul.addr %s181, 18
        %s183 = smul.addr %s182, 4
        %s184 = scalar_lea.vmem %s0, %s183
        %p185 = pneg %p50
        %p186 = pneg %p47
        %p187 = scmp.lt.s32.totalorder %s22, 0
        %s188 = scalar_select %p187, %s22, 0
        %s189 = smul.addr %s188, 2
        %s190 = scalar_lea.vmem %s1, %s189
        %p191 = pneg %p76
        %p192 = pneg %p73
        %p193 = scmp.lt.s32.totalorder %s22, 0
        %s194 = scalar_select %p193, %s22, 0
        %s195 = scalar_lea.vmem %s2, %s194
        %p196 = pneg %p102
        %p197 = pneg %p99
        %p198 = pneg %p130
        %p199 = pneg %p127
        %s200 = sand.u32 %s117, 1
        %s201 = scalar_lea.sflag [#allocation3], %s200
        %s202 = sand.u32 %s117, 1
        %s203 = smul.addr %s202, 64
        %s204 = scalar_lea.vmem [#allocation2], %s203
        %s205 = smul.u32 4, %s21
        %p206 = scmp.lt.s32.totalorder %s205, 7
        %s207 = scalar_select %p206, %s205, 7
        %s208 = smul.addr %s207, 18
        %s209 = smul.addr %s208, 4
        %s210 = scalar_lea.vmem %s0, %s209
        %s211 = smul.u32 4, %s21
        %p212 = scmp.lt.s32.totalorder %s22, 0
        %s213 = scalar_select %p212, %s22, 0
        %s214 = smul.addr %s213, 2
        %s215 = scalar_lea.vmem %s1, %s214
        %p216 = scmp.lt.s32.totalorder %s22, 0
        %s217 = scalar_select %p216, %s22, 0
        %s218 = scalar_lea.vmem %s2, %s217
        %v220 = vld [vmem:[%s210] sm:$0xf]
        %v221 = vld [vmem:[%s210 + $0x4] sm:$0x1]
        %v222 = vld [vmem:[%s210 + $0x8] sm:$0xf]
        %v223 = vld [vmem:[%s210 + $0xc] sm:$0x1]
        %v224 = vld [vmem:[%s210 + $0x10] sm:$0xf]
        %v225 = vld [vmem:[%s210 + $0x14] sm:$0x1]
        %v226 = vld [vmem:[%s210 + $0x18] sm:$0xf]
        %v227 = vld [vmem:[%s210 + $0x1c] sm:$0x1]
        %v228 = vld [vmem:[%s210 + $0x20] sm:$0xf]
        %v229 = vld [vmem:[%s210 + $0x24] sm:$0x1]
        %v230 = vld [vmem:[%s210 + $0x28] sm:$0xf]
        %v231 = vld [vmem:[%s210 + $0x2c] sm:$0x1]
        %v232 = vld [vmem:[%s210 + $0x30] sm:$0xf]
        %v233 = vld [vmem:[%s210 + $0x34] sm:$0x1]
        %v234 = vld [vmem:[%s210 + $0x38] sm:$0xf]
        %v235 = vld [vmem:[%s210 + $0x3c] sm:$0x1]
        %v236 = vld [vmem:[%s210 + $0x40] sm:$0xf]
        %v237 = vld [vmem:[%s210 + $0x44] sm:$0x1]
        %v238 = vld [vmem:[%s215] sm:$0x3]
        %s239 = scalar_lea.vmem %s215, 16
        %v240 = vld [vmem:[%s239] sm:$0x3]
        %v249 = vunpack.c.l.b16 %v222
        %v250 = vunpack.c.l.b16 %v224
        %v251 = vunpack.c.l.b16 %v226
        %v252 = vunpack.c.l.b16 %v228
        %v253 = vunpack.c.l.b16 %v230
        %v254 = vunpack.c.l.b16 %v232
        %v255 = vunpack.c.l.b16 %v234
        %v256 = vunpack.c.l.b16 %v236
        %v257 = vpack.c.b16 %v250, %v249
        %v258 = vpack.c.b16 %v252, %v251
        %v259 = vpack.c.b16 %v254, %v253
        %v260 = vpack.c.b16 %v256, %v255
        %vm261 = vcmask 31744
        %v263 = vsel %vm261, %v257, 0
        %v266 = vsel %vm261, %v258, 0
        %v269 = vsel %vm261, %v259, 0
        %v272 = vsel %vm261, %v260, 0
        %vm274 = vcmask 1041408
        %v276 = vsel %vm274, %v240, 0
        %278 = vmatprep.subr.bf16.mxu0 0
        %279 = vmatpush1.bf16.msra.mxu0 0
        %280 = vmatprep.subr.bf16.mxu0 0
        %281 = vmatpush1.bf16.msra.mxu0 0
        %282 = vmatprep.subr.bf16.mxu0 0
        %283 = vmatpush1.bf16.msra.mxu0 0
        %284 = vmatprep.subr.bf16.mxu0 0
        %285 = vmatpush1.bf16.msra.mxu0 0
        %286 = vmatprep.subr.bf16.mxu0 0
        %287 = vmatpush1.bf16.msra.mxu0 0
        %288 = vmatprep.subr.bf16.mxu0 0
        %289 = vmatpush1.bf16.msra.mxu0 0
        %290 = vmatprep.subr.bf16.mxu0 0
        %291 = vmatpush1.bf16.msra.mxu0 0
        %292 = vmatprep.subr.bf16.mxu0 0
        %293 = vmatpush1.bf16.msra.mxu0 %v276
        %294 = vmatprep.subr.bf16.mxu0 0
        %295 = vmatpush2.bf16.msra.mxu0 0
        %296 = vmatprep.subr.bf16.mxu0 0
        %297 = vmatpush2.bf16.msra.mxu0 0
        %298 = vmatprep.subr.bf16.mxu0 0
        %299 = vmatpush2.bf16.msra.mxu0 0
        %300 = vmatprep.subr.bf16.mxu0 0
        %301 = vmatpush2.bf16.msra.mxu0 0
        %302 = vmatprep.subr.bf16.mxu0 0
        %303 = vmatpush2.bf16.msra.mxu0 0
        %304 = vmatprep.subr.bf16.mxu0 0
        %305 = vmatpush2.bf16.msra.mxu0 0
        %306 = vmatprep.subr.bf16.mxu0 0
        %307 = vmatpush2.bf16.msra.mxu0 0
        %308 = vmatprep.subr.bf16.mxu0 0
        %309 = vmatpush2.bf16.msra.mxu0 0
        %310 = vmatprep.mubr.bf16.mxu0 0
        %311 = vmatmul.mubr.bf16.gmra.mxu0 %v263
        %v312 = vpop.f32.mrf.mxu0
        %v313 = vadd.f32 0.0, %v312
        %v314 = vpop.f32.mrf.mxu0
        %v315 = vpop.f32.mrf.mxu0
        %v316 = vadd.f32 0.0, %v315
        %v317 = vpop.f32.mrf.mxu0
        %318 = vmatprep.mubr.bf16.mxu0 0
        %319 = vmatmul.mubr.bf16.gmra.mxu0 %v266
        %v320 = vpop.f32.mrf.mxu0
        %v321 = vadd.f32 0.0, %v320
        %v322 = vpop.f32.mrf.mxu0
        %v323 = vpop.f32.mrf.mxu0
        %v324 = vadd.f32 0.0, %v323
        %v325 = vpop.f32.mrf.mxu0
        %326 = vmatprep.mubr.bf16.mxu0 0
        %327 = vmatmul.mubr.bf16.gmra.mxu0 %v269
        %v328 = vpop.f32.mrf.mxu0
        %v329 = vadd.f32 0.0, %v328
        %v330 = vpop.f32.mrf.mxu0
        %v331 = vpop.f32.mrf.mxu0
        %v332 = vadd.f32 0.0, %v331
        %v333 = vpop.f32.mrf.mxu0
        %334 = vmatprep.mubr.bf16.mxu0 0
        %335 = vmatmul.mubr.bf16.gmra.mxu0 %v272
        %v336 = vpop.f32.mrf.mxu0
        %v337 = vadd.f32 0.0, %v336
        %v338 = vpop.f32.mrf.mxu0
        %v339 = vpop.f32.mrf.mxu0
        %v340 = vadd.f32 0.0, %v339
        %v341 = vpop.f32.mrf.mxu0
        %342 = vdwg.mxu0
        %v344 = vunpack.c.l.b16 %v220
        %v345 = vpack.c.b16 %v249, %v344
        %v346 = vpack.c.b16 %v251, %v250
        %v347 = vpack.c.b16 %v253, %v252
        %v348 = vpack.c.b16 %v255, %v254
        %v350 = vsel %vm261, %v345, 0
        %v353 = vsel %vm261, %v346, 0
        %v356 = vsel %vm261, %v347, 0
        %v359 = vsel %vm261, %v348, 0
        %v362 = vsel %vm274, %v238, 0
        %364 = vmatprep.subr.bf16.mxu0 0
        %365 = vmatpush1.bf16.msra.mxu0 0
        %366 = vmatprep.subr.bf16.mxu0 0
        %367 = vmatpush1.bf16.msra.mxu0 0
        %368 = vmatprep.subr.bf16.mxu0 0
        %369 = vmatpush1.bf16.msra.mxu0 0
        %370 = vmatprep.subr.bf16.mxu0 0
        %371 = vmatpush1.bf16.msra.mxu0 0
        %372 = vmatprep.subr.bf16.mxu0 0
        %373 = vmatpush1.bf16.msra.mxu0 0
        %374 = vmatprep.subr.bf16.mxu0 0
        %375 = vmatpush1.bf16.msra.mxu0 0
        %376 = vmatprep.subr.bf16.mxu0 0
        %377 = vmatpush1.bf16.msra.mxu0 0
        %378 = vmatprep.subr.bf16.mxu0 0
        %379 = vmatpush1.bf16.msra.mxu0 %v362
        %380 = vmatprep.subr.bf16.mxu0 0
        %381 = vmatpush2.bf16.msra.mxu0 0
        %382 = vmatprep.subr.bf16.mxu0 0
        %383 = vmatpush2.bf16.msra.mxu0 0
        %384 = vmatprep.subr.bf16.mxu0 0
        %385 = vmatpush2.bf16.msra.mxu0 0
        %386 = vmatprep.subr.bf16.mxu0 0
        %387 = vmatpush2.bf16.msra.mxu0 0
        %388 = vmatprep.subr.bf16.mxu0 0
        %389 = vmatpush2.bf16.msra.mxu0 0
        %390 = vmatprep.subr.bf16.mxu0 0
        %391 = vmatpush2.bf16.msra.mxu0 0
        %392 = vmatprep.subr.bf16.mxu0 0
        %393 = vmatpush2.bf16.msra.mxu0 0
        %394 = vmatprep.subr.bf16.mxu0 0
        %395 = vmatpush2.bf16.msra.mxu0 0
        %396 = vmatprep.mubr.bf16.mxu0 0
        %397 = vmatmul.mubr.bf16.gmra.mxu0 %v350
        %v398 = vpop.f32.mrf.mxu0
        %v399 = vadd.f32 %v313, %v398
        %v400 = vpop.f32.mrf.mxu0
        %v401 = vpop.f32.mrf.mxu0
        %v402 = vadd.f32 %v316, %v401
        %v403 = vpop.f32.mrf.mxu0
        %404 = vmatprep.mubr.bf16.mxu0 0
        %405 = vmatmul.mubr.bf16.gmra.mxu0 %v353
        %v406 = vpop.f32.mrf.mxu0
        %v407 = vadd.f32 %v321, %v406
        %v408 = vpop.f32.mrf.mxu0
        %v409 = vpop.f32.mrf.mxu0
        %v410 = vadd.f32 %v324, %v409
        %v411 = vpop.f32.mrf.mxu0
        %412 = vmatprep.mubr.bf16.mxu0 0
        %413 = vmatmul.mubr.bf16.gmra.mxu0 %v356
        %v414 = vpop.f32.mrf.mxu0
        %v415 = vadd.f32 %v329, %v414
        %v416 = vpop.f32.mrf.mxu0
        %v417 = vpop.f32.mrf.mxu0
        %v418 = vadd.f32 %v332, %v417
        %v419 = vpop.f32.mrf.mxu0
        %420 = vmatprep.mubr.bf16.mxu0 0
        %421 = vmatmul.mubr.bf16.gmra.mxu0 %v359
        %v422 = vpop.f32.mrf.mxu0
        %v423 = vadd.f32 %v337, %v422
        %v424 = vpop.f32.mrf.mxu0
        %v425 = vpop.f32.mrf.mxu0
        %v426 = vadd.f32 %v340, %v425
        %v427 = vpop.f32.mrf.mxu0
        %428 = vdwg.mxu0
        %vm429 = vsmask.f32 3328
        %vm430 = vsmask.f32 7440
        %vm431 = vmor %vm429, %vm430
        %v433 = vshrl.u32 %v220, 16
        %v435 = vrot.slane %v433, 4
        %v436 = vshll.u32 %v220, 16
        %v438 = vrot.slane %v436, 5
        %v439 = vor.u32 %v435, %v438
        %v440 = vrot.slane %v439, 4
        %v442 = vshll.u32 %v221, 16
        %v444 = vrot.slane %v442, 5
        %v445 = vsel %vm431, %v440, %v444
        %v447 = vshrl.u32 %v222, 16
        %v449 = vrot.slane %v447, 4
        %v450 = vshll.u32 %v222, 16
        %v452 = vrot.slane %v450, 5
        %v453 = vor.u32 %v449, %v452
        %v454 = vrot.slane %v453, 4
        %v456 = vshll.u32 %v223, 16
        %v458 = vrot.slane %v456, 5
        %v459 = vsel %vm431, %v454, %v458
        %v461 = vshrl.u32 %v224, 16
        %v463 = vrot.slane %v461, 4
        %v464 = vshll.u32 %v224, 16
        %v466 = vrot.slane %v464, 5
        %v467 = vor.u32 %v463, %v466
        %v468 = vrot.slane %v467, 4
        %v470 = vshll.u32 %v225, 16
        %v472 = vrot.slane %v470, 5
        %v473 = vsel %vm431, %v468, %v472
        %v475 = vshrl.u32 %v226, 16
        %v477 = vrot.slane %v475, 4
        %v478 = vshll.u32 %v226, 16
        %v480 = vrot.slane %v478, 5
        %v481 = vor.u32 %v477, %v480
        %v482 = vrot.slane %v481, 4
        %v484 = vshll.u32 %v227, 16
        %v486 = vrot.slane %v484, 5
        %v487 = vsel %vm431, %v482, %v486
        %v489 = vshrl.u32 %v228, 16
        %v491 = vrot.slane %v489, 4
        %v492 = vshll.u32 %v228, 16
        %v494 = vrot.slane %v492, 5
        %v495 = vor.u32 %v491, %v494
        %v496 = vrot.slane %v495, 4
        %v498 = vshll.u32 %v229, 16
        %v500 = vrot.slane %v498, 5
        %v501 = vsel %vm431, %v496, %v500
        %v503 = vshrl.u32 %v230, 16
        %v505 = vrot.slane %v503, 4
        %v506 = vshll.u32 %v230, 16
        %v508 = vrot.slane %v506, 5
        %v509 = vor.u32 %v505, %v508
        %v510 = vrot.slane %v509, 4
        %v512 = vshll.u32 %v231, 16
        %v514 = vrot.slane %v512, 5
        %v515 = vsel %vm431, %v510, %v514
        %v517 = vshrl.u32 %v232, 16
        %v519 = vrot.slane %v517, 4
        %v520 = vshll.u32 %v232, 16
        %v522 = vrot.slane %v520, 5
        %v523 = vor.u32 %v519, %v522
        %v524 = vrot.slane %v523, 4
        %v526 = vshll.u32 %v233, 16
        %v528 = vrot.slane %v526, 5
        %v529 = vsel %vm431, %v524, %v528
        %v531 = vshrl.u32 %v234, 16
        %v533 = vrot.slane %v531, 4
        %v534 = vshll.u32 %v234, 16
        %v536 = vrot.slane %v534, 5
        %v537 = vor.u32 %v533, %v536
        %v538 = vrot.slane %v537, 4
        %v540 = vshll.u32 %v235, 16
        %v542 = vrot.slane %v540, 5
        %v543 = vsel %vm431, %v538, %v542
        %s544 = scalar_lea.vmem %s215, 4
        %v545 = vld [vmem:[%s544] sm:$0x3]
        %v546 = vunpack.c.l.b16 %v445
        %v547 = vunpack.c.l.b16 %v459
        %v548 = vunpack.c.l.b16 %v473
        %v549 = vunpack.c.l.b16 %v487
        %v550 = vunpack.c.l.b16 %v501
        %v551 = vunpack.c.l.b16 %v515
        %v552 = vunpack.c.l.b16 %v529
        %v553 = vunpack.c.l.b16 %v543
        %v554 = vpack.c.b16 %v547, %v546
        %v555 = vpack.c.b16 %v549, %v548
        %v556 = vpack.c.b16 %v551, %v550
        %v557 = vpack.c.b16 %v553, %v552
        %v559 = vsel %vm261, %v554, 0
        %v562 = vsel %vm261, %v555, 0
        %v565 = vsel %vm261, %v556, 0
        %v568 = vsel %vm261, %v557, 0
        %v571 = vsel %vm274, %v545, 0
        %573 = vmatprep.subr.bf16.mxu0 0
        %574 = vmatpush1.bf16.msra.mxu0 0
        %575 = vmatprep.subr.bf16.mxu0 0
        %576 = vmatpush1.bf16.msra.mxu0 0
        %577 = vmatprep.subr.bf16.mxu0 0
        %578 = vmatpush1.bf16.msra.mxu0 0
        %579 = vmatprep.subr.bf16.mxu0 0
        %580 = vmatpush1.bf16.msra.mxu0 0
        %581 = vmatprep.subr.bf16.mxu0 0
        %582 = vmatpush1.bf16.msra.mxu0 0
        %583 = vmatprep.subr.bf16.mxu0 0
        %584 = vmatpush1.bf16.msra.mxu0 0
        %585 = vmatprep.subr.bf16.mxu0 0
        %586 = vmatpush1.bf16.msra.mxu0 0
        %587 = vmatprep.subr.bf16.mxu0 0
        %588 = vmatpush1.bf16.msra.mxu0 %v571
        %589 = vmatprep.subr.bf16.mxu0 0
        %590 = vmatpush2.bf16.msra.mxu0 0
        %591 = vmatprep.subr.bf16.mxu0 0
        %592 = vmatpush2.bf16.msra.mxu0 0
        %593 = vmatprep.subr.bf16.mxu0 0
        %594 = vmatpush2.bf16.msra.mxu0 0
        %595 = vmatprep.subr.bf16.mxu0 0
        %596 = vmatpush2.bf16.msra.mxu0 0
        %597 = vmatprep.subr.bf16.mxu0 0
        %598 = vmatpush2.bf16.msra.mxu0 0
        %599 = vmatprep.subr.bf16.mxu0 0
        %600 = vmatpush2.bf16.msra.mxu0 0
        %601 = vmatprep.subr.bf16.mxu0 0
        %602 = vmatpush2.bf16.msra.mxu0 0
        %603 = vmatprep.subr.bf16.mxu0 0
        %604 = vmatpush2.bf16.msra.mxu0 0
        %605 = vmatprep.mubr.bf16.mxu0 0
        %606 = vmatmul.mubr.bf16.gmra.mxu0 %v559
        %v607 = vpop.f32.mrf.mxu0
        %v608 = vadd.f32 0.0, %v607
        %v609 = vpop.f32.mrf.mxu0
        %v610 = vpop.f32.mrf.mxu0
        %v611 = vadd.f32 0.0, %v610
        %v612 = vpop.f32.mrf.mxu0
        %613 = vmatprep.mubr.bf16.mxu0 0
        %614 = vmatmul.mubr.bf16.gmra.mxu0 %v562
        %v615 = vpop.f32.mrf.mxu0
        %v616 = vadd.f32 0.0, %v615
        %v617 = vpop.f32.mrf.mxu0
        %v618 = vpop.f32.mrf.mxu0
        %v619 = vadd.f32 0.0, %v618
        %v620 = vpop.f32.mrf.mxu0
        %621 = vmatprep.mubr.bf16.mxu0 0
        %622 = vmatmul.mubr.bf16.gmra.mxu0 %v565
        %v623 = vpop.f32.mrf.mxu0
        %v624 = vadd.f32 0.0, %v623
        %v625 = vpop.f32.mrf.mxu0
        %v626 = vpop.f32.mrf.mxu0
        %v627 = vadd.f32 0.0, %v626
        %v628 = vpop.f32.mrf.mxu0
        %629 = vmatprep.mubr.bf16.mxu0 0
        %630 = vmatmul.mubr.bf16.gmra.mxu0 %v568
        %v631 = vpop.f32.mrf.mxu0
        %v632 = vadd.f32 0.0, %v631
        %v633 = vpop.f32.mrf.mxu0
        %v634 = vpop.f32.mrf.mxu0
        %v635 = vadd.f32 0.0, %v634
        %v636 = vpop.f32.mrf.mxu0
        %637 = vdwg.mxu0
        %v638 = vadd.f32 %v399, %v608
        %v639 = vadd.f32 %v402, %v611
        %v640 = vadd.f32 %v407, %v616
        %v641 = vadd.f32 %v410, %v619
        %v642 = vadd.f32 %v415, %v624
        %v643 = vadd.f32 %v418, %v627
        %v644 = vadd.f32 %v423, %v632
        %v645 = vadd.f32 %v426, %v635
        %v647 = vshrl.u32 %v236, 16
        %v649 = vrot.slane %v647, 4
        %v650 = vshll.u32 %v236, 16
        %v652 = vrot.slane %v650, 5
        %v653 = vor.u32 %v649, %v652
        %v654 = vrot.slane %v653, 4
        %v656 = vshll.u32 %v237, 16
        %v658 = vrot.slane %v656, 5
        %v659 = vsel %vm431, %v654, %v658
        %s660 = scalar_lea.vmem %s215, 20
        %v661 = vld [vmem:[%s660] sm:$0x3]
        %v662 = vunpack.c.l.b16 %v659
        %v663 = vpack.c.b16 %v548, %v547
        %v664 = vpack.c.b16 %v550, %v549
        %v665 = vpack.c.b16 %v552, %v551
        %v666 = vpack.c.b16 %v662, %v553
        %v668 = vsel %vm261, %v663, 0
        %v671 = vsel %vm261, %v664, 0
        %v674 = vsel %vm261, %v665, 0
        %v677 = vsel %vm261, %v666, 0
        %v680 = vsel %vm274, %v661, 0
        %682 = vmatprep.subr.bf16.mxu0 0
        %683 = vmatpush1.bf16.msra.mxu0 0
        %684 = vmatprep.subr.bf16.mxu0 0
        %685 = vmatpush1.bf16.msra.mxu0 0
        %686 = vmatprep.subr.bf16.mxu0 0
        %687 = vmatpush1.bf16.msra.mxu0 0
        %688 = vmatprep.subr.bf16.mxu0 0
        %689 = vmatpush1.bf16.msra.mxu0 0
        %690 = vmatprep.subr.bf16.mxu0 0
        %691 = vmatpush1.bf16.msra.mxu0 0
        %692 = vmatprep.subr.bf16.mxu0 0
        %693 = vmatpush1.bf16.msra.mxu0 0
        %694 = vmatprep.subr.bf16.mxu0 0
        %695 = vmatpush1.bf16.msra.mxu0 0
        %696 = vmatprep.subr.bf16.mxu0 0
        %697 = vmatpush1.bf16.msra.mxu0 %v680
        %698 = vmatprep.subr.bf16.mxu0 0
        %699 = vmatpush2.bf16.msra.mxu0 0
        %700 = vmatprep.subr.bf16.mxu0 0
        %701 = vmatpush2.bf16.msra.mxu0 0
        %702 = vmatprep.subr.bf16.mxu0 0
        %703 = vmatpush2.bf16.msra.mxu0 0
        %704 = vmatprep.subr.bf16.mxu0 0
        %705 = vmatpush2.bf16.msra.mxu0 0
        %706 = vmatprep.subr.bf16.mxu0 0
        %707 = vmatpush2.bf16.msra.mxu0 0
        %708 = vmatprep.subr.bf16.mxu0 0
        %709 = vmatpush2.bf16.msra.mxu0 0
        %710 = vmatprep.subr.bf16.mxu0 0
        %711 = vmatpush2.bf16.msra.mxu0 0
        %712 = vmatprep.subr.bf16.mxu0 0
        %713 = vmatpush2.bf16.msra.mxu0 0
        %714 = vmatprep.mubr.bf16.mxu0 0
        %715 = vmatmul.mubr.bf16.gmra.mxu0 %v668
        %v716 = vpop.f32.mrf.mxu0
        %v717 = vadd.f32 0.0, %v716
        %v718 = vpop.f32.mrf.mxu0
        %v719 = vpop.f32.mrf.mxu0
        %v720 = vadd.f32 0.0, %v719
        %v721 = vpop.f32.mrf.mxu0
        %722 = vmatprep.mubr.bf16.mxu0 0
        %723 = vmatmul.mubr.bf16.gmra.mxu0 %v671
        %v724 = vpop.f32.mrf.mxu0
        %v725 = vadd.f32 0.0, %v724
        %v726 = vpop.f32.mrf.mxu0
        %v727 = vpop.f32.mrf.mxu0
        %v728 = vadd.f32 0.0, %v727
        %v729 = vpop.f32.mrf.mxu0
        %730 = vmatprep.mubr.bf16.mxu0 0
        %731 = vmatmul.mubr.bf16.gmra.mxu0 %v674
        %v732 = vpop.f32.mrf.mxu0
        %v733 = vadd.f32 0.0, %v732
        %v734 = vpop.f32.mrf.mxu0
        %v735 = vpop.f32.mrf.mxu0
        %v736 = vadd.f32 0.0, %v735
        %v737 = vpop.f32.mrf.mxu0
        %738 = vmatprep.mubr.bf16.mxu0 0
        %739 = vmatmul.mubr.bf16.gmra.mxu0 %v677
        %v740 = vpop.f32.mrf.mxu0
        %v741 = vadd.f32 0.0, %v740
        %v742 = vpop.f32.mrf.mxu0
        %v743 = vpop.f32.mrf.mxu0
        %v744 = vadd.f32 0.0, %v743
        %v745 = vpop.f32.mrf.mxu0
        %746 = vdwg.mxu0
        %v747 = vadd.f32 %v638, %v717
        %v748 = vadd.f32 %v639, %v720
        %v749 = vadd.f32 %v640, %v725
        %v750 = vadd.f32 %v641, %v728
        %v751 = vadd.f32 %v642, %v733
        %v752 = vadd.f32 %v643, %v736
        %v753 = vadd.f32 %v644, %v741
        %v754 = vadd.f32 %v645, %v744
        %s755 = scalar_lea.vmem %s210, 72
        %v756 = vld [vmem:[%s755] sm:$0xf]
        %v757 = vld [vmem:[%s755 + $0x4] sm:$0x1]
        %v758 = vld [vmem:[%s755 + $0x8] sm:$0xf]
        %v759 = vld [vmem:[%s755 + $0xc] sm:$0x1]
        %v760 = vld [vmem:[%s755 + $0x10] sm:$0xf]
        %v761 = vld [vmem:[%s755 + $0x14] sm:$0x1]
        %v762 = vld [vmem:[%s755 + $0x18] sm:$0xf]
        %v763 = vld [vmem:[%s755 + $0x1c] sm:$0x1]
        %v764 = vld [vmem:[%s755 + $0x20] sm:$0xf]
        %v765 = vld [vmem:[%s755 + $0x24] sm:$0x1]
        %v766 = vld [vmem:[%s755 + $0x28] sm:$0xf]
        %v767 = vld [vmem:[%s755 + $0x2c] sm:$0x1]
        %v768 = vld [vmem:[%s755 + $0x30] sm:$0xf]
        %v769 = vld [vmem:[%s755 + $0x34] sm:$0x1]
        %v770 = vld [vmem:[%s755 + $0x38] sm:$0xf]
        %v771 = vld [vmem:[%s755 + $0x3c] sm:$0x1]
        %v772 = vld [vmem:[%s755 + $0x40] sm:$0xf]
        %v773 = vld [vmem:[%s755 + $0x44] sm:$0x1]
        %s774 = scalar_lea.vmem %s215, 2
        %v775 = vld [vmem:[%s774] sm:$0x3]
        %v784 = vunpack.c.l.b16 %v756
        %v785 = vunpack.c.l.b16 %v758
        %v786 = vunpack.c.l.b16 %v760
        %v787 = vunpack.c.l.b16 %v762
        %v788 = vunpack.c.l.b16 %v764
        %v789 = vunpack.c.l.b16 %v766
        %v790 = vunpack.c.l.b16 %v768
        %v791 = vunpack.c.l.b16 %v770
        %v792 = vpack.c.b16 %v785, %v784
        %v793 = vpack.c.b16 %v787, %v786
        %v794 = vpack.c.b16 %v789, %v788
        %v795 = vpack.c.b16 %v791, %v790
        %v797 = vsel %vm261, %v792, 0
        %v800 = vsel %vm261, %v793, 0
        %v803 = vsel %vm261, %v794, 0
        %v806 = vsel %vm261, %v795, 0
        %v809 = vsel %vm274, %v775, 0
        %811 = vmatprep.subr.bf16.mxu0 0
        %812 = vmatpush1.bf16.msra.mxu0 0
        %813 = vmatprep.subr.bf16.mxu0 0
        %814 = vmatpush1.bf16.msra.mxu0 0
        %815 = vmatprep.subr.bf16.mxu0 0
        %816 = vmatpush1.bf16.msra.mxu0 0
        %817 = vmatprep.subr.bf16.mxu0 0
        %818 = vmatpush1.bf16.msra.mxu0 0
        %819 = vmatprep.subr.bf16.mxu0 0
        %820 = vmatpush1.bf16.msra.mxu0 0
        %821 = vmatprep.subr.bf16.mxu0 0
        %822 = vmatpush1.bf16.msra.mxu0 0
        %823 = vmatprep.subr.bf16.mxu0 0
        %824 = vmatpush1.bf16.msra.mxu0 0
        %825 = vmatprep.subr.bf16.mxu0 0
        %826 = vmatpush1.bf16.msra.mxu0 %v809
        %827 = vmatprep.subr.bf16.mxu0 0
        %828 = vmatpush2.bf16.msra.mxu0 0
        %829 = vmatprep.subr.bf16.mxu0 0
        %830 = vmatpush2.bf16.msra.mxu0 0
        %831 = vmatprep.subr.bf16.mxu0 0
        %832 = vmatpush2.bf16.msra.mxu0 0
        %833 = vmatprep.subr.bf16.mxu0 0
        %834 = vmatpush2.bf16.msra.mxu0 0
        %835 = vmatprep.subr.bf16.mxu0 0
        %836 = vmatpush2.bf16.msra.mxu0 0
        %837 = vmatprep.subr.bf16.mxu0 0
        %838 = vmatpush2.bf16.msra.mxu0 0
        %839 = vmatprep.subr.bf16.mxu0 0
        %840 = vmatpush2.bf16.msra.mxu0 0
        %841 = vmatprep.subr.bf16.mxu0 0
        %842 = vmatpush2.bf16.msra.mxu0 0
        %843 = vmatprep.mubr.bf16.mxu0 0
        %844 = vmatmul.mubr.bf16.gmra.mxu0 %v797
        %v845 = vpop.f32.mrf.mxu0
        %v846 = vadd.f32 0.0, %v845
        %v847 = vpop.f32.mrf.mxu0
        %v848 = vpop.f32.mrf.mxu0
        %v849 = vadd.f32 0.0, %v848
        %v850 = vpop.f32.mrf.mxu0
        %851 = vmatprep.mubr.bf16.mxu0 0
        %852 = vmatmul.mubr.bf16.gmra.mxu0 %v800
        %v853 = vpop.f32.mrf.mxu0
        %v854 = vadd.f32 0.0, %v853
        %v855 = vpop.f32.mrf.mxu0
        %v856 = vpop.f32.mrf.mxu0
        %v857 = vadd.f32 0.0, %v856
        %v858 = vpop.f32.mrf.mxu0
        %859 = vmatprep.mubr.bf16.mxu0 0
        %860 = vmatmul.mubr.bf16.gmra.mxu0 %v803
        %v861 = vpop.f32.mrf.mxu0
        %v862 = vadd.f32 0.0, %v861
        %v863 = vpop.f32.mrf.mxu0
        %v864 = vpop.f32.mrf.mxu0
        %v865 = vadd.f32 0.0, %v864
        %v866 = vpop.f32.mrf.mxu0
        %867 = vmatprep.mubr.bf16.mxu0 0
        %868 = vmatmul.mubr.bf16.gmra.mxu0 %v806
        %v869 = vpop.f32.mrf.mxu0
        %v870 = vadd.f32 0.0, %v869
        %v871 = vpop.f32.mrf.mxu0
        %v872 = vpop.f32.mrf.mxu0
        %v873 = vadd.f32 0.0, %v872
        %v874 = vpop.f32.mrf.mxu0
        %875 = vdwg.mxu0
        %v876 = vadd.f32 %v747, %v846
        %v877 = vadd.f32 %v748, %v849
        %v878 = vadd.f32 %v749, %v854
        %v879 = vadd.f32 %v750, %v857
        %v880 = vadd.f32 %v751, %v862
        %v881 = vadd.f32 %v752, %v865
        %v882 = vadd.f32 %v753, %v870
        %v883 = vadd.f32 %v754, %v873
        %s884 = scalar_lea.vmem %s215, 18
        %v885 = vld [vmem:[%s884] sm:$0x3]
        %v887 = vunpack.c.l.b16 %v772
        %v888 = vpack.c.b16 %v786, %v785
        %v889 = vpack.c.b16 %v788, %v787
        %v890 = vpack.c.b16 %v790, %v789
        %v891 = vpack.c.b16 %v887, %v791
        %v893 = vsel %vm261, %v888, 0
        %v896 = vsel %vm261, %v889, 0
        %v899 = vsel %vm261, %v890, 0
        %v902 = vsel %vm261, %v891, 0
        %v905 = vsel %vm274, %v885, 0
        %907 = vmatprep.subr.bf16.mxu0 0
        %908 = vmatpush1.bf16.msra.mxu0 0
        %909 = vmatprep.subr.bf16.mxu0 0
        %910 = vmatpush1.bf16.msra.mxu0 0
        %911 = vmatprep.subr.bf16.mxu0 0
        %912 = vmatpush1.bf16.msra.mxu0 0
        %913 = vmatprep.subr.bf16.mxu0 0
        %914 = vmatpush1.bf16.msra.mxu0 0
        %915 = vmatprep.subr.bf16.mxu0 0
        %916 = vmatpush1.bf16.msra.mxu0 0
        %917 = vmatprep.subr.bf16.mxu0 0
        %918 = vmatpush1.bf16.msra.mxu0 0
        %919 = vmatprep.subr.bf16.mxu0 0
        %920 = vmatpush1.bf16.msra.mxu0 0
        %921 = vmatprep.subr.bf16.mxu0 0
        %922 = vmatpush1.bf16.msra.mxu0 %v905
        %923 = vmatprep.subr.bf16.mxu0 0
        %924 = vmatpush2.bf16.msra.mxu0 0
        %925 = vmatprep.subr.bf16.mxu0 0
        %926 = vmatpush2.bf16.msra.mxu0 0
        %927 = vmatprep.subr.bf16.mxu0 0
        %928 = vmatpush2.bf16.msra.mxu0 0
        %929 = vmatprep.subr.bf16.mxu0 0
        %930 = vmatpush2.bf16.msra.mxu0 0
        %931 = vmatprep.subr.bf16.mxu0 0
        %932 = vmatpush2.bf16.msra.mxu0 0
        %933 = vmatprep.subr.bf16.mxu0 0
        %934 = vmatpush2.bf16.msra.mxu0 0
        %935 = vmatprep.subr.bf16.mxu0 0
        %936 = vmatpush2.bf16.msra.mxu0 0
        %937 = vmatprep.subr.bf16.mxu0 0
        %938 = vmatpush2.bf16.msra.mxu0 0
        %939 = vmatprep.mubr.bf16.mxu0 0
        %940 = vmatmul.mubr.bf16.gmra.mxu0 %v893
        %v941 = vpop.f32.mrf.mxu0
        %v942 = vadd.f32 0.0, %v941
        %v943 = vpop.f32.mrf.mxu0
        %v944 = vpop.f32.mrf.mxu0
        %v945 = vadd.f32 0.0, %v944
        %v946 = vpop.f32.mrf.mxu0
        %947 = vmatprep.mubr.bf16.mxu0 0
        %948 = vmatmul.mubr.bf16.gmra.mxu0 %v896
        %v949 = vpop.f32.mrf.mxu0
        %v950 = vadd.f32 0.0, %v949
        %v951 = vpop.f32.mrf.mxu0
        %v952 = vpop.f32.mrf.mxu0
        %v953 = vadd.f32 0.0, %v952
        %v954 = vpop.f32.mrf.mxu0
        %955 = vmatprep.mubr.bf16.mxu0 0
        %956 = vmatmul.mubr.bf16.gmra.mxu0 %v899
        %v957 = vpop.f32.mrf.mxu0
        %v958 = vadd.f32 0.0, %v957
        %v959 = vpop.f32.mrf.mxu0
        %v960 = vpop.f32.mrf.mxu0
        %v961 = vadd.f32 0.0, %v960
        %v962 = vpop.f32.mrf.mxu0
        %963 = vmatprep.mubr.bf16.mxu0 0
        %964 = vmatmul.mubr.bf16.gmra.mxu0 %v902
        %v965 = vpop.f32.mrf.mxu0
        %v966 = vadd.f32 0.0, %v965
        %v967 = vpop.f32.mrf.mxu0
        %v968 = vpop.f32.mrf.mxu0
        %v969 = vadd.f32 0.0, %v968
        %v970 = vpop.f32.mrf.mxu0
        %971 = vdwg.mxu0
        %v972 = vadd.f32 %v876, %v942
        %v973 = vadd.f32 %v877, %v945
        %v974 = vadd.f32 %v878, %v950
        %v975 = vadd.f32 %v879, %v953
        %v976 = vadd.f32 %v880, %v958
        %v977 = vadd.f32 %v881, %v961
        %v978 = vadd.f32 %v882, %v966
        %v979 = vadd.f32 %v883, %v969
        %v981 = vshrl.u32 %v756, 16
        %v983 = vrot.slane %v981, 4
        %v984 = vshll.u32 %v756, 16
        %v986 = vrot.slane %v984, 5
        %v987 = vor.u32 %v983, %v986
        %v988 = vrot.slane %v987, 4
        %v990 = vshll.u32 %v757, 16
        %v992 = vrot.slane %v990, 5
        %v993 = vsel %vm431, %v988, %v992
        %v995 = vshrl.u32 %v758, 16
        %v997 = vrot.slane %v995, 4
        %v998 = vshll.u32 %v758, 16
        %v1000 = vrot.slane %v998, 5
        %v1001 = vor.u32 %v997, %v1000
        %v1002 = vrot.slane %v1001, 4
        %v1004 = vshll.u32 %v759, 16
        %v1006 = vrot.slane %v1004, 5
        %v1007 = vsel %vm431, %v1002, %v1006
        %v1009 = vshrl.u32 %v760, 16
        %v1011 = vrot.slane %v1009, 4
        %v1012 = vshll.u32 %v760, 16
        %v1014 = vrot.slane %v1012, 5
        %v1015 = vor.u32 %v1011, %v1014
        %v1016 = vrot.slane %v1015, 4
        %v1018 = vshll.u32 %v761, 16
        %v1020 = vrot.slane %v1018, 5
        %v1021 = vsel %vm431, %v1016, %v1020
        %v1023 = vshrl.u32 %v762, 16
        %v1025 = vrot.slane %v1023, 4
        %v1026 = vshll.u32 %v762, 16
        %v1028 = vrot.slane %v1026, 5
        %v1029 = vor.u32 %v1025, %v1028
        %v1030 = vrot.slane %v1029, 4
        %v1032 = vshll.u32 %v763, 16
        %v1034 = vrot.slane %v1032, 5
        %v1035 = vsel %vm431, %v1030, %v1034
        %v1037 = vshrl.u32 %v764, 16
        %v1039 = vrot.slane %v1037, 4
        %v1040 = vshll.u32 %v764, 16
        %v1042 = vrot.slane %v1040, 5
        %v1043 = vor.u32 %v1039, %v1042
        %v1044 = vrot.slane %v1043, 4
        %v1046 = vshll.u32 %v765, 16
        %v1048 = vrot.slane %v1046, 5
        %v1049 = vsel %vm431, %v1044, %v1048
        %v1051 = vshrl.u32 %v766, 16
        %v1053 = vrot.slane %v1051, 4
        %v1054 = vshll.u32 %v766, 16
        %v1056 = vrot.slane %v1054, 5
        %v1057 = vor.u32 %v1053, %v1056
        %v1058 = vrot.slane %v1057, 4
        %v1060 = vshll.u32 %v767, 16
        %v1062 = vrot.slane %v1060, 5
        %v1063 = vsel %vm431, %v1058, %v1062
        %v1065 = vshrl.u32 %v768, 16
        %v1067 = vrot.slane %v1065, 4
        %v1068 = vshll.u32 %v768, 16
        %v1070 = vrot.slane %v1068, 5
        %v1071 = vor.u32 %v1067, %v1070
        %v1072 = vrot.slane %v1071, 4
        %v1074 = vshll.u32 %v769, 16
        %v1076 = vrot.slane %v1074, 5
        %v1077 = vsel %vm431, %v1072, %v1076
        %v1079 = vshrl.u32 %v770, 16
        %v1081 = vrot.slane %v1079, 4
        %v1082 = vshll.u32 %v770, 16
        %v1084 = vrot.slane %v1082, 5
        %v1085 = vor.u32 %v1081, %v1084
        %v1086 = vrot.slane %v1085, 4
        %v1088 = vshll.u32 %v771, 16
        %v1090 = vrot.slane %v1088, 5
        %v1091 = vsel %vm431, %v1086, %v1090
        %s1092 = scalar_lea.vmem %s215, 6
        %v1093 = vld [vmem:[%s1092] sm:$0x3]
        %v1094 = vunpack.c.l.b16 %v993
        %v1095 = vunpack.c.l.b16 %v1007
        %v1096 = vunpack.c.l.b16 %v1021
        %v1097 = vunpack.c.l.b16 %v1035
        %v1098 = vunpack.c.l.b16 %v1049
        %v1099 = vunpack.c.l.b16 %v1063
        %v1100 = vunpack.c.l.b16 %v1077
        %v1101 = vunpack.c.l.b16 %v1091
        %v1102 = vpack.c.b16 %v1095, %v1094
        %v1103 = vpack.c.b16 %v1097, %v1096
        %v1104 = vpack.c.b16 %v1099, %v1098
        %v1105 = vpack.c.b16 %v1101, %v1100
        %v1107 = vsel %vm261, %v1102, 0
        %v1110 = vsel %vm261, %v1103, 0
        %v1113 = vsel %vm261, %v1104, 0
        %v1116 = vsel %vm261, %v1105, 0
        %v1119 = vsel %vm274, %v1093, 0
        %1121 = vmatprep.subr.bf16.mxu0 0
        %1122 = vmatpush1.bf16.msra.mxu0 0
        %1123 = vmatprep.subr.bf16.mxu0 0
        %1124 = vmatpush1.bf16.msra.mxu0 0
        %1125 = vmatprep.subr.bf16.mxu0 0
        %1126 = vmatpush1.bf16.msra.mxu0 0
        %1127 = vmatprep.subr.bf16.mxu0 0
        %1128 = vmatpush1.bf16.msra.mxu0 0
        %1129 = vmatprep.subr.bf16.mxu0 0
        %1130 = vmatpush1.bf16.msra.mxu0 0
        %1131 = vmatprep.subr.bf16.mxu0 0
        %1132 = vmatpush1.bf16.msra.mxu0 0
        %1133 = vmatprep.subr.bf16.mxu0 0
        %1134 = vmatpush1.bf16.msra.mxu0 0
        %1135 = vmatprep.subr.bf16.mxu0 0
        %1136 = vmatpush1.bf16.msra.mxu0 %v1119
        %1137 = vmatprep.subr.bf16.mxu0 0
        %1138 = vmatpush2.bf16.msra.mxu0 0
        %1139 = vmatprep.subr.bf16.mxu0 0
        %1140 = vmatpush2.bf16.msra.mxu0 0
        %1141 = vmatprep.subr.bf16.mxu0 0
        %1142 = vmatpush2.bf16.msra.mxu0 0
        %1143 = vmatprep.subr.bf16.mxu0 0
        %1144 = vmatpush2.bf16.msra.mxu0 0
        %1145 = vmatprep.subr.bf16.mxu0 0
        %1146 = vmatpush2.bf16.msra.mxu0 0
        %1147 = vmatprep.subr.bf16.mxu0 0
        %1148 = vmatpush2.bf16.msra.mxu0 0
        %1149 = vmatprep.subr.bf16.mxu0 0
        %1150 = vmatpush2.bf16.msra.mxu0 0
        %1151 = vmatprep.subr.bf16.mxu0 0
        %1152 = vmatpush2.bf16.msra.mxu0 0
        %1153 = vmatprep.mubr.bf16.mxu0 0
        %1154 = vmatmul.mubr.bf16.gmra.mxu0 %v1107
        %v1155 = vpop.f32.mrf.mxu0
        %v1156 = vadd.f32 0.0, %v1155
        %v1157 = vpop.f32.mrf.mxu0
        %v1158 = vpop.f32.mrf.mxu0
        %v1159 = vadd.f32 0.0, %v1158
        %v1160 = vpop.f32.mrf.mxu0
        %1161 = vmatprep.mubr.bf16.mxu0 0
        %1162 = vmatmul.mubr.bf16.gmra.mxu0 %v1110
        %v1163 = vpop.f32.mrf.mxu0
        %v1164 = vadd.f32 0.0, %v1163
        %v1165 = vpop.f32.mrf.mxu0
        %v1166 = vpop.f32.mrf.mxu0
        %v1167 = vadd.f32 0.0, %v1166
        %v1168 = vpop.f32.mrf.mxu0
        %1169 = vmatprep.mubr.bf16.mxu0 0
        %1170 = vmatmul.mubr.bf16.gmra.mxu0 %v1113
        %v1171 = vpop.f32.mrf.mxu0
        %v1172 = vadd.f32 0.0, %v1171
        %v1173 = vpop.f32.mrf.mxu0
        %v1174 = vpop.f32.mrf.mxu0
        %v1175 = vadd.f32 0.0, %v1174
        %v1176 = vpop.f32.mrf.mxu0
        %1177 = vmatprep.mubr.bf16.mxu0 0
        %1178 = vmatmul.mubr.bf16.gmra.mxu0 %v1116
        %v1179 = vpop.f32.mrf.mxu0
        %v1180 = vadd.f32 0.0, %v1179
        %v1181 = vpop.f32.mrf.mxu0
        %v1182 = vpop.f32.mrf.mxu0
        %v1183 = vadd.f32 0.0, %v1182
        %v1184 = vpop.f32.mrf.mxu0
        %1185 = vdwg.mxu0
        %v1186 = vadd.f32 %v972, %v1156
        %v1187 = vadd.f32 %v973, %v1159
        %v1188 = vadd.f32 %v974, %v1164
        %v1189 = vadd.f32 %v975, %v1167
        %v1190 = vadd.f32 %v976, %v1172
        %v1191 = vadd.f32 %v977, %v1175
        %v1192 = vadd.f32 %v978, %v1180
        %v1193 = vadd.f32 %v979, %v1183
        %v1195 = vshrl.u32 %v772, 16
        %v1197 = vrot.slane %v1195, 4
        %v1198 = vshll.u32 %v772, 16
        %v1200 = vrot.slane %v1198, 5
        %v1201 = vor.u32 %v1197, %v1200
        %v1202 = vrot.slane %v1201, 4
        %v1204 = vshll.u32 %v773, 16
        %v1206 = vrot.slane %v1204, 5
        %v1207 = vsel %vm431, %v1202, %v1206
        %s1208 = scalar_lea.vmem %s215, 22
        %v1209 = vld [vmem:[%s1208] sm:$0x3]
        %v1210 = vunpack.c.l.b16 %v1207
        %v1211 = vpack.c.b16 %v1096, %v1095
        %v1212 = vpack.c.b16 %v1098, %v1097
        %v1213 = vpack.c.b16 %v1100, %v1099
        %v1214 = vpack.c.b16 %v1210, %v1101
        %v1216 = vsel %vm261, %v1211, 0
        %v1219 = vsel %vm261, %v1212, 0
        %v1222 = vsel %vm261, %v1213, 0
        %v1225 = vsel %vm261, %v1214, 0
        %v1228 = vsel %vm274, %v1209, 0
        %1230 = vmatprep.subr.bf16.mxu0 0
        %1231 = vmatpush1.bf16.msra.mxu0 0
        %1232 = vmatprep.subr.bf16.mxu0 0
        %1233 = vmatpush1.bf16.msra.mxu0 0
        %1234 = vmatprep.subr.bf16.mxu0 0
        %1235 = vmatpush1.bf16.msra.mxu0 0
        %1236 = vmatprep.subr.bf16.mxu0 0
        %1237 = vmatpush1.bf16.msra.mxu0 0
        %1238 = vmatprep.subr.bf16.mxu0 0
        %1239 = vmatpush1.bf16.msra.mxu0 0
        %1240 = vmatprep.subr.bf16.mxu0 0
        %1241 = vmatpush1.bf16.msra.mxu0 0
        %1242 = vmatprep.subr.bf16.mxu0 0
        %1243 = vmatpush1.bf16.msra.mxu0 0
        %1244 = vmatprep.subr.bf16.mxu0 0
        %1245 = vmatpush1.bf16.msra.mxu0 %v1228
        %1246 = vmatprep.subr.bf16.mxu0 0
        %1247 = vmatpush2.bf16.msra.mxu0 0
        %1248 = vmatprep.subr.bf16.mxu0 0
        %1249 = vmatpush2.bf16.msra.mxu0 0
        %1250 = vmatprep.subr.bf16.mxu0 0
        %1251 = vmatpush2.bf16.msra.mxu0 0
        %1252 = vmatprep.subr.bf16.mxu0 0
        %1253 = vmatpush2.bf16.msra.mxu0 0
        %1254 = vmatprep.subr.bf16.mxu0 0
        %1255 = vmatpush2.bf16.msra.mxu0 0
        %1256 = vmatprep.subr.bf16.mxu0 0
        %1257 = vmatpush2.bf16.msra.mxu0 0
        %1258 = vmatprep.subr.bf16.mxu0 0
        %1259 = vmatpush2.bf16.msra.mxu0 0
        %1260 = vmatprep.subr.bf16.mxu0 0
        %1261 = vmatpush2.bf16.msra.mxu0 0
        %1262 = vmatprep.mubr.bf16.mxu0 0
        %1263 = vmatmul.mubr.bf16.gmra.mxu0 %v1216
        %v1264 = vpop.f32.mrf.mxu0
        %v1265 = vadd.f32 0.0, %v1264
        %v1266 = vpop.f32.mrf.mxu0
        %v1267 = vpop.f32.mrf.mxu0
        %v1268 = vadd.f32 0.0, %v1267
        %v1269 = vpop.f32.mrf.mxu0
        %1270 = vmatprep.mubr.bf16.mxu0 0
        %1271 = vmatmul.mubr.bf16.gmra.mxu0 %v1219
        %v1272 = vpop.f32.mrf.mxu0
        %v1273 = vadd.f32 0.0, %v1272
        %v1274 = vpop.f32.mrf.mxu0
        %v1275 = vpop.f32.mrf.mxu0
        %v1276 = vadd.f32 0.0, %v1275
        %v1277 = vpop.f32.mrf.mxu0
        %1278 = vmatprep.mubr.bf16.mxu0 0
        %1279 = vmatmul.mubr.bf16.gmra.mxu0 %v1222
        %v1280 = vpop.f32.mrf.mxu0
        %v1281 = vadd.f32 0.0, %v1280
        %v1282 = vpop.f32.mrf.mxu0
        %v1283 = vpop.f32.mrf.mxu0
        %v1284 = vadd.f32 0.0, %v1283
        %v1285 = vpop.f32.mrf.mxu0
        %1286 = vmatprep.mubr.bf16.mxu0 0
        %1287 = vmatmul.mubr.bf16.gmra.mxu0 %v1225
        %v1288 = vpop.f32.mrf.mxu0
        %v1289 = vadd.f32 0.0, %v1288
        %v1290 = vpop.f32.mrf.mxu0
        %v1291 = vpop.f32.mrf.mxu0
        %v1292 = vadd.f32 0.0, %v1291
        %v1293 = vpop.f32.mrf.mxu0
        %1294 = vdwg.mxu0
        %v1295 = vadd.f32 %v1186, %v1265
        %v1296 = vadd.f32 %v1187, %v1268
        %v1297 = vadd.f32 %v1188, %v1273
        %v1298 = vadd.f32 %v1189, %v1276
        %v1299 = vadd.f32 %v1190, %v1281
        %v1300 = vadd.f32 %v1191, %v1284
        %v1301 = vadd.f32 %v1192, %v1289
        %v1302 = vadd.f32 %v1193, %v1292
        %s1303 = scalar_lea.vmem %s210, 144
        %v1304 = vld [vmem:[%s1303] sm:$0xf]
        %v1305 = vld [vmem:[%s1303 + $0x4] sm:$0x1]
        %v1306 = vld [vmem:[%s1303 + $0x8] sm:$0xf]
        %v1307 = vld [vmem:[%s1303 + $0xc] sm:$0x1]
        %v1308 = vld [vmem:[%s1303 + $0x10] sm:$0xf]
        %v1309 = vld [vmem:[%s1303 + $0x14] sm:$0x1]
        %v1310 = vld [vmem:[%s1303 + $0x18] sm:$0xf]
        %v1311 = vld [vmem:[%s1303 + $0x1c] sm:$0x1]
        %v1312 = vld [vmem:[%s1303 + $0x20] sm:$0xf]
        %v1313 = vld [vmem:[%s1303 + $0x24] sm:$0x1]
        %v1314 = vld [vmem:[%s1303 + $0x28] sm:$0xf]
        %v1315 = vld [vmem:[%s1303 + $0x2c] sm:$0x1]
        %v1316 = vld [vmem:[%s1303 + $0x30] sm:$0xf]
        %v1317 = vld [vmem:[%s1303 + $0x34] sm:$0x1]
        %v1318 = vld [vmem:[%s1303 + $0x38] sm:$0xf]
        %v1319 = vld [vmem:[%s1303 + $0x3c] sm:$0x1]
        %v1320 = vld [vmem:[%s1303 + $0x40] sm:$0xf]
        %v1321 = vld [vmem:[%s1303 + $0x44] sm:$0x1]
        %s1322 = scalar_lea.vmem %s215, 8
        %v1323 = vld [vmem:[%s1322] sm:$0x3]
        %v1332 = vunpack.c.l.b16 %v1304
        %v1333 = vunpack.c.l.b16 %v1306
        %v1334 = vunpack.c.l.b16 %v1308
        %v1335 = vunpack.c.l.b16 %v1310
        %v1336 = vunpack.c.l.b16 %v1312
        %v1337 = vunpack.c.l.b16 %v1314
        %v1338 = vunpack.c.l.b16 %v1316
        %v1339 = vunpack.c.l.b16 %v1318
        %v1340 = vpack.c.b16 %v1333, %v1332
        %v1341 = vpack.c.b16 %v1335, %v1334
        %v1342 = vpack.c.b16 %v1337, %v1336
        %v1343 = vpack.c.b16 %v1339, %v1338
        %v1345 = vsel %vm261, %v1340, 0
        %v1348 = vsel %vm261, %v1341, 0
        %v1351 = vsel %vm261, %v1342, 0
        %v1354 = vsel %vm261, %v1343, 0
        %v1357 = vsel %vm274, %v1323, 0
        %1359 = vmatprep.subr.bf16.mxu0 0
        %1360 = vmatpush1.bf16.msra.mxu0 0
        %1361 = vmatprep.subr.bf16.mxu0 0
        %1362 = vmatpush1.bf16.msra.mxu0 0
        %1363 = vmatprep.subr.bf16.mxu0 0
        %1364 = vmatpush1.bf16.msra.mxu0 0
        %1365 = vmatprep.subr.bf16.mxu0 0
        %1366 = vmatpush1.bf16.msra.mxu0 0
        %1367 = vmatprep.subr.bf16.mxu0 0
        %1368 = vmatpush1.bf16.msra.mxu0 0
        %1369 = vmatprep.subr.bf16.mxu0 0
        %1370 = vmatpush1.bf16.msra.mxu0 0
        %1371 = vmatprep.subr.bf16.mxu0 0
        %1372 = vmatpush1.bf16.msra.mxu0 0
        %1373 = vmatprep.subr.bf16.mxu0 0
        %1374 = vmatpush1.bf16.msra.mxu0 %v1357
        %1375 = vmatprep.subr.bf16.mxu0 0
        %1376 = vmatpush2.bf16.msra.mxu0 0
        %1377 = vmatprep.subr.bf16.mxu0 0
        %1378 = vmatpush2.bf16.msra.mxu0 0
        %1379 = vmatprep.subr.bf16.mxu0 0
        %1380 = vmatpush2.bf16.msra.mxu0 0
        %1381 = vmatprep.subr.bf16.mxu0 0
        %1382 = vmatpush2.bf16.msra.mxu0 0
        %1383 = vmatprep.subr.bf16.mxu0 0
        %1384 = vmatpush2.bf16.msra.mxu0 0
        %1385 = vmatprep.subr.bf16.mxu0 0
        %1386 = vmatpush2.bf16.msra.mxu0 0
        %1387 = vmatprep.subr.bf16.mxu0 0
        %1388 = vmatpush2.bf16.msra.mxu0 0
        %1389 = vmatprep.subr.bf16.mxu0 0
        %1390 = vmatpush2.bf16.msra.mxu0 0
        %1391 = vmatprep.mubr.bf16.mxu0 0
        %1392 = vmatmul.mubr.bf16.gmra.mxu0 %v1345
        %v1393 = vpop.f32.mrf.mxu0
        %v1394 = vadd.f32 0.0, %v1393
        %v1395 = vpop.f32.mrf.mxu0
        %v1396 = vpop.f32.mrf.mxu0
        %v1397 = vadd.f32 0.0, %v1396
        %v1398 = vpop.f32.mrf.mxu0
        %1399 = vmatprep.mubr.bf16.mxu0 0
        %1400 = vmatmul.mubr.bf16.gmra.mxu0 %v1348
        %v1401 = vpop.f32.mrf.mxu0
        %v1402 = vadd.f32 0.0, %v1401
        %v1403 = vpop.f32.mrf.mxu0
        %v1404 = vpop.f32.mrf.mxu0
        %v1405 = vadd.f32 0.0, %v1404
        %v1406 = vpop.f32.mrf.mxu0
        %1407 = vmatprep.mubr.bf16.mxu0 0
        %1408 = vmatmul.mubr.bf16.gmra.mxu0 %v1351
        %v1409 = vpop.f32.mrf.mxu0
        %v1410 = vadd.f32 0.0, %v1409
        %v1411 = vpop.f32.mrf.mxu0
        %v1412 = vpop.f32.mrf.mxu0
        %v1413 = vadd.f32 0.0, %v1412
        %v1414 = vpop.f32.mrf.mxu0
        %1415 = vmatprep.mubr.bf16.mxu0 0
        %1416 = vmatmul.mubr.bf16.gmra.mxu0 %v1354
        %v1417 = vpop.f32.mrf.mxu0
        %v1418 = vadd.f32 0.0, %v1417
        %v1419 = vpop.f32.mrf.mxu0
        %v1420 = vpop.f32.mrf.mxu0
        %v1421 = vadd.f32 0.0, %v1420
        %v1422 = vpop.f32.mrf.mxu0
        %1423 = vdwg.mxu0
        %v1424 = vadd.f32 %v1295, %v1394
        %v1425 = vadd.f32 %v1296, %v1397
        %v1426 = vadd.f32 %v1297, %v1402
        %v1427 = vadd.f32 %v1298, %v1405
        %v1428 = vadd.f32 %v1299, %v1410
        %v1429 = vadd.f32 %v1300, %v1413
        %v1430 = vadd.f32 %v1301, %v1418
        %v1431 = vadd.f32 %v1302, %v1421
        %s1432 = scalar_lea.vmem %s215, 24
        %v1433 = vld [vmem:[%s1432] sm:$0x3]
        %v1435 = vunpack.c.l.b16 %v1320
        %v1436 = vpack.c.b16 %v1334, %v1333
        %v1437 = vpack.c.b16 %v1336, %v1335
        %v1438 = vpack.c.b16 %v1338, %v1337
        %v1439 = vpack.c.b16 %v1435, %v1339
        %v1441 = vsel %vm261, %v1436, 0
        %v1444 = vsel %vm261, %v1437, 0
        %v1447 = vsel %vm261, %v1438, 0
        %v1450 = vsel %vm261, %v1439, 0
        %v1453 = vsel %vm274, %v1433, 0
        %1455 = vmatprep.subr.bf16.mxu0 0
        %1456 = vmatpush1.bf16.msra.mxu0 0
        %1457 = vmatprep.subr.bf16.mxu0 0
        %1458 = vmatpush1.bf16.msra.mxu0 0
        %1459 = vmatprep.subr.bf16.mxu0 0
        %1460 = vmatpush1.bf16.msra.mxu0 0
        %1461 = vmatprep.subr.bf16.mxu0 0
        %1462 = vmatpush1.bf16.msra.mxu0 0
        %1463 = vmatprep.subr.bf16.mxu0 0
        %1464 = vmatpush1.bf16.msra.mxu0 0
        %1465 = vmatprep.subr.bf16.mxu0 0
        %1466 = vmatpush1.bf16.msra.mxu0 0
        %1467 = vmatprep.subr.bf16.mxu0 0
        %1468 = vmatpush1.bf16.msra.mxu0 0
        %1469 = vmatprep.subr.bf16.mxu0 0
        %1470 = vmatpush1.bf16.msra.mxu0 %v1453
        %1471 = vmatprep.subr.bf16.mxu0 0
        %1472 = vmatpush2.bf16.msra.mxu0 0
        %1473 = vmatprep.subr.bf16.mxu0 0
        %1474 = vmatpush2.bf16.msra.mxu0 0
        %1475 = vmatprep.subr.bf16.mxu0 0
        %1476 = vmatpush2.bf16.msra.mxu0 0
        %1477 = vmatprep.subr.bf16.mxu0 0
        %1478 = vmatpush2.bf16.msra.mxu0 0
        %1479 = vmatprep.subr.bf16.mxu0 0
        %1480 = vmatpush2.bf16.msra.mxu0 0
        %1481 = vmatprep.subr.bf16.mxu0 0
        %1482 = vmatpush2.bf16.msra.mxu0 0
        %1483 = vmatprep.subr.bf16.mxu0 0
        %1484 = vmatpush2.bf16.msra.mxu0 0
        %1485 = vmatprep.subr.bf16.mxu0 0
        %1486 = vmatpush2.bf16.msra.mxu0 0
        %1487 = vmatprep.mubr.bf16.mxu0 0
        %1488 = vmatmul.mubr.bf16.gmra.mxu0 %v1441
        %v1489 = vpop.f32.mrf.mxu0
        %v1490 = vadd.f32 0.0, %v1489
        %v1491 = vpop.f32.mrf.mxu0
        %v1492 = vpop.f32.mrf.mxu0
        %v1493 = vadd.f32 0.0, %v1492
        %v1494 = vpop.f32.mrf.mxu0
        %1495 = vmatprep.mubr.bf16.mxu0 0
        %1496 = vmatmul.mubr.bf16.gmra.mxu0 %v1444
        %v1497 = vpop.f32.mrf.mxu0
        %v1498 = vadd.f32 0.0, %v1497
        %v1499 = vpop.f32.mrf.mxu0
        %v1500 = vpop.f32.mrf.mxu0
        %v1501 = vadd.f32 0.0, %v1500
        %v1502 = vpop.f32.mrf.mxu0
        %1503 = vmatprep.mubr.bf16.mxu0 0
        %1504 = vmatmul.mubr.bf16.gmra.mxu0 %v1447
        %v1505 = vpop.f32.mrf.mxu0
        %v1506 = vadd.f32 0.0, %v1505
        %v1507 = vpop.f32.mrf.mxu0
        %v1508 = vpop.f32.mrf.mxu0
        %v1509 = vadd.f32 0.0, %v1508
        %v1510 = vpop.f32.mrf.mxu0
        %1511 = vmatprep.mubr.bf16.mxu0 0
        %1512 = vmatmul.mubr.bf16.gmra.mxu0 %v1450
        %v1513 = vpop.f32.mrf.mxu0
        %v1514 = vadd.f32 0.0, %v1513
        %v1515 = vpop.f32.mrf.mxu0
        %v1516 = vpop.f32.mrf.mxu0
        %v1517 = vadd.f32 0.0, %v1516
        %v1518 = vpop.f32.mrf.mxu0
        %1519 = vdwg.mxu0
        %v1520 = vadd.f32 %v1424, %v1490
        %v1521 = vadd.f32 %v1425, %v1493
        %v1522 = vadd.f32 %v1426, %v1498
        %v1523 = vadd.f32 %v1427, %v1501
        %v1524 = vadd.f32 %v1428, %v1506
        %v1525 = vadd.f32 %v1429, %v1509
        %v1526 = vadd.f32 %v1430, %v1514
        %v1527 = vadd.f32 %v1431, %v1517
        %v1529 = vshrl.u32 %v1304, 16
        %v1531 = vrot.slane %v1529, 4
        %v1532 = vshll.u32 %v1304, 16
        %v1534 = vrot.slane %v1532, 5
        %v1535 = vor.u32 %v1531, %v1534
        %v1536 = vrot.slane %v1535, 4
        %v1538 = vshll.u32 %v1305, 16
        %v1540 = vrot.slane %v1538, 5
        %v1541 = vsel %vm431, %v1536, %v1540
        %v1543 = vshrl.u32 %v1306, 16
        %v1545 = vrot.slane %v1543, 4
        %v1546 = vshll.u32 %v1306, 16
        %v1548 = vrot.slane %v1546, 5
        %v1549 = vor.u32 %v1545, %v1548
        %v1550 = vrot.slane %v1549, 4
        %v1552 = vshll.u32 %v1307, 16
        %v1554 = vrot.slane %v1552, 5
        %v1555 = vsel %vm431, %v1550, %v1554
        %v1557 = vshrl.u32 %v1308, 16
        %v1559 = vrot.slane %v1557, 4
        %v1560 = vshll.u32 %v1308, 16
        %v1562 = vrot.slane %v1560, 5
        %v1563 = vor.u32 %v1559, %v1562
        %v1564 = vrot.slane %v1563, 4
        %v1566 = vshll.u32 %v1309, 16
        %v1568 = vrot.slane %v1566, 5
        %v1569 = vsel %vm431, %v1564, %v1568
        %v1571 = vshrl.u32 %v1310, 16
        %v1573 = vrot.slane %v1571, 4
        %v1574 = vshll.u32 %v1310, 16
        %v1576 = vrot.slane %v1574, 5
        %v1577 = vor.u32 %v1573, %v1576
        %v1578 = vrot.slane %v1577, 4
        %v1580 = vshll.u32 %v1311, 16
        %v1582 = vrot.slane %v1580, 5
        %v1583 = vsel %vm431, %v1578, %v1582
        %v1585 = vshrl.u32 %v1312, 16
        %v1587 = vrot.slane %v1585, 4
        %v1588 = vshll.u32 %v1312, 16
        %v1590 = vrot.slane %v1588, 5
        %v1591 = vor.u32 %v1587, %v1590
        %v1592 = vrot.slane %v1591, 4
        %v1594 = vshll.u32 %v1313, 16
        %v1596 = vrot.slane %v1594, 5
        %v1597 = vsel %vm431, %v1592, %v1596
        %v1599 = vshrl.u32 %v1314, 16
        %v1601 = vrot.slane %v1599, 4
        %v1602 = vshll.u32 %v1314, 16
        %v1604 = vrot.slane %v1602, 5
        %v1605 = vor.u32 %v1601, %v1604
        %v1606 = vrot.slane %v1605, 4
        %v1608 = vshll.u32 %v1315, 16
        %v1610 = vrot.slane %v1608, 5
        %v1611 = vsel %vm431, %v1606, %v1610
        %v1613 = vshrl.u32 %v1316, 16
        %v1615 = vrot.slane %v1613, 4
        %v1616 = vshll.u32 %v1316, 16
        %v1618 = vrot.slane %v1616, 5
        %v1619 = vor.u32 %v1615, %v1618
        %v1620 = vrot.slane %v1619, 4
        %v1622 = vshll.u32 %v1317, 16
        %v1624 = vrot.slane %v1622, 5
        %v1625 = vsel %vm431, %v1620, %v1624
        %v1627 = vshrl.u32 %v1318, 16
        %v1629 = vrot.slane %v1627, 4
        %v1630 = vshll.u32 %v1318, 16
        %v1632 = vrot.slane %v1630, 5
        %v1633 = vor.u32 %v1629, %v1632
        %v1634 = vrot.slane %v1633, 4
        %v1636 = vshll.u32 %v1319, 16
        %v1638 = vrot.slane %v1636, 5
        %v1639 = vsel %vm431, %v1634, %v1638
        %s1640 = scalar_lea.vmem %s215, 12
        %v1641 = vld [vmem:[%s1640] sm:$0x3]
        %v1642 = vunpack.c.l.b16 %v1541
        %v1643 = vunpack.c.l.b16 %v1555
        %v1644 = vunpack.c.l.b16 %v1569
        %v1645 = vunpack.c.l.b16 %v1583
        %v1646 = vunpack.c.l.b16 %v1597
        %v1647 = vunpack.c.l.b16 %v1611
        %v1648 = vunpack.c.l.b16 %v1625
        %v1649 = vunpack.c.l.b16 %v1639
        %v1650 = vpack.c.b16 %v1643, %v1642
        %v1651 = vpack.c.b16 %v1645, %v1644
        %v1652 = vpack.c.b16 %v1647, %v1646
        %v1653 = vpack.c.b16 %v1649, %v1648
        %v1655 = vsel %vm261, %v1650, 0
        %v1658 = vsel %vm261, %v1651, 0
        %v1661 = vsel %vm261, %v1652, 0
        %v1664 = vsel %vm261, %v1653, 0
        %v1667 = vsel %vm274, %v1641, 0
        %1669 = vmatprep.subr.bf16.mxu0 0
        %1670 = vmatpush1.bf16.msra.mxu0 0
        %1671 = vmatprep.subr.bf16.mxu0 0
        %1672 = vmatpush1.bf16.msra.mxu0 0
        %1673 = vmatprep.subr.bf16.mxu0 0
        %1674 = vmatpush1.bf16.msra.mxu0 0
        %1675 = vmatprep.subr.bf16.mxu0 0
        %1676 = vmatpush1.bf16.msra.mxu0 0
        %1677 = vmatprep.subr.bf16.mxu0 0
        %1678 = vmatpush1.bf16.msra.mxu0 0
        %1679 = vmatprep.subr.bf16.mxu0 0
        %1680 = vmatpush1.bf16.msra.mxu0 0
        %1681 = vmatprep.subr.bf16.mxu0 0
        %1682 = vmatpush1.bf16.msra.mxu0 0
        %1683 = vmatprep.subr.bf16.mxu0 0
        %1684 = vmatpush1.bf16.msra.mxu0 %v1667
        %1685 = vmatprep.subr.bf16.mxu0 0
        %1686 = vmatpush2.bf16.msra.mxu0 0
        %1687 = vmatprep.subr.bf16.mxu0 0
        %1688 = vmatpush2.bf16.msra.mxu0 0
        %1689 = vmatprep.subr.bf16.mxu0 0
        %1690 = vmatpush2.bf16.msra.mxu0 0
        %1691 = vmatprep.subr.bf16.mxu0 0
        %1692 = vmatpush2.bf16.msra.mxu0 0
        %1693 = vmatprep.subr.bf16.mxu0 0
        %1694 = vmatpush2.bf16.msra.mxu0 0
        %1695 = vmatprep.subr.bf16.mxu0 0
        %1696 = vmatpush2.bf16.msra.mxu0 0
        %1697 = vmatprep.subr.bf16.mxu0 0
        %1698 = vmatpush2.bf16.msra.mxu0 0
        %1699 = vmatprep.subr.bf16.mxu0 0
        %1700 = vmatpush2.bf16.msra.mxu0 0
        %1701 = vmatprep.mubr.bf16.mxu0 0
        %1702 = vmatmul.mubr.bf16.gmra.mxu0 %v1655
        %v1703 = vpop.f32.mrf.mxu0
        %v1704 = vadd.f32 0.0, %v1703
        %v1705 = vpop.f32.mrf.mxu0
        %v1706 = vpop.f32.mrf.mxu0
        %v1707 = vadd.f32 0.0, %v1706
        %v1708 = vpop.f32.mrf.mxu0
        %1709 = vmatprep.mubr.bf16.mxu0 0
        %1710 = vmatmul.mubr.bf16.gmra.mxu0 %v1658
        %v1711 = vpop.f32.mrf.mxu0
        %v1712 = vadd.f32 0.0, %v1711
        %v1713 = vpop.f32.mrf.mxu0
        %v1714 = vpop.f32.mrf.mxu0
        %v1715 = vadd.f32 0.0, %v1714
        %v1716 = vpop.f32.mrf.mxu0
        %1717 = vmatprep.mubr.bf16.mxu0 0
        %1718 = vmatmul.mubr.bf16.gmra.mxu0 %v1661
        %v1719 = vpop.f32.mrf.mxu0
        %v1720 = vadd.f32 0.0, %v1719
        %v1721 = vpop.f32.mrf.mxu0
        %v1722 = vpop.f32.mrf.mxu0
        %v1723 = vadd.f32 0.0, %v1722
        %v1724 = vpop.f32.mrf.mxu0
        %1725 = vmatprep.mubr.bf16.mxu0 0
        %1726 = vmatmul.mubr.bf16.gmra.mxu0 %v1664
        %v1727 = vpop.f32.mrf.mxu0
        %v1728 = vadd.f32 0.0, %v1727
        %v1729 = vpop.f32.mrf.mxu0
        %v1730 = vpop.f32.mrf.mxu0
        %v1731 = vadd.f32 0.0, %v1730
        %v1732 = vpop.f32.mrf.mxu0
        %1733 = vdwg.mxu0
        %v1734 = vadd.f32 %v1520, %v1704
        %v1735 = vadd.f32 %v1521, %v1707
        %v1736 = vadd.f32 %v1522, %v1712
        %v1737 = vadd.f32 %v1523, %v1715
        %v1738 = vadd.f32 %v1524, %v1720
        %v1739 = vadd.f32 %v1525, %v1723
        %v1740 = vadd.f32 %v1526, %v1728
        %v1741 = vadd.f32 %v1527, %v1731
        %v1743 = vshrl.u32 %v1320, 16
        %v1745 = vrot.slane %v1743, 4
        %v1746 = vshll.u32 %v1320, 16
        %v1748 = vrot.slane %v1746, 5
        %v1749 = vor.u32 %v1745, %v1748
        %v1750 = vrot.slane %v1749, 4
        %v1752 = vshll.u32 %v1321, 16
        %v1754 = vrot.slane %v1752, 5
        %v1755 = vsel %vm431, %v1750, %v1754
        %s1756 = scalar_lea.vmem %s215, 28
        %v1757 = vld [vmem:[%s1756] sm:$0x3]
        %v1758 = vunpack.c.l.b16 %v1755
        %v1759 = vpack.c.b16 %v1644, %v1643
        %v1760 = vpack.c.b16 %v1646, %v1645
        %v1761 = vpack.c.b16 %v1648, %v1647
        %v1762 = vpack.c.b16 %v1758, %v1649
        %v1764 = vsel %vm261, %v1759, 0
        %v1767 = vsel %vm261, %v1760, 0
        %v1770 = vsel %vm261, %v1761, 0
        %v1773 = vsel %vm261, %v1762, 0
        %v1776 = vsel %vm274, %v1757, 0
        %1778 = vmatprep.subr.bf16.mxu0 0
        %1779 = vmatpush1.bf16.msra.mxu0 0
        %1780 = vmatprep.subr.bf16.mxu0 0
        %1781 = vmatpush1.bf16.msra.mxu0 0
        %1782 = vmatprep.subr.bf16.mxu0 0
        %1783 = vmatpush1.bf16.msra.mxu0 0
        %1784 = vmatprep.subr.bf16.mxu0 0
        %1785 = vmatpush1.bf16.msra.mxu0 0
        %1786 = vmatprep.subr.bf16.mxu0 0
        %1787 = vmatpush1.bf16.msra.mxu0 0
        %1788 = vmatprep.subr.bf16.mxu0 0
        %1789 = vmatpush1.bf16.msra.mxu0 0
        %1790 = vmatprep.subr.bf16.mxu0 0
        %1791 = vmatpush1.bf16.msra.mxu0 0
        %1792 = vmatprep.subr.bf16.mxu0 0
        %1793 = vmatpush1.bf16.msra.mxu0 %v1776
        %1794 = vmatprep.subr.bf16.mxu0 0
        %1795 = vmatpush2.bf16.msra.mxu0 0
        %1796 = vmatprep.subr.bf16.mxu0 0
        %1797 = vmatpush2.bf16.msra.mxu0 0
        %1798 = vmatprep.subr.bf16.mxu0 0
        %1799 = vmatpush2.bf16.msra.mxu0 0
        %1800 = vmatprep.subr.bf16.mxu0 0
        %1801 = vmatpush2.bf16.msra.mxu0 0
        %1802 = vmatprep.subr.bf16.mxu0 0
        %1803 = vmatpush2.bf16.msra.mxu0 0
        %1804 = vmatprep.subr.bf16.mxu0 0
        %1805 = vmatpush2.bf16.msra.mxu0 0
        %1806 = vmatprep.subr.bf16.mxu0 0
        %1807 = vmatpush2.bf16.msra.mxu0 0
        %1808 = vmatprep.subr.bf16.mxu0 0
        %1809 = vmatpush2.bf16.msra.mxu0 0
        %1810 = vmatprep.mubr.bf16.mxu0 0
        %1811 = vmatmul.mubr.bf16.gmra.mxu0 %v1764
        %v1812 = vpop.f32.mrf.mxu0
        %v1813 = vadd.f32 0.0, %v1812
        %v1814 = vpop.f32.mrf.mxu0
        %v1815 = vpop.f32.mrf.mxu0
        %v1816 = vadd.f32 0.0, %v1815
        %v1817 = vpop.f32.mrf.mxu0
        %1818 = vmatprep.mubr.bf16.mxu0 0
        %1819 = vmatmul.mubr.bf16.gmra.mxu0 %v1767
        %v1820 = vpop.f32.mrf.mxu0
        %v1821 = vadd.f32 0.0, %v1820
        %v1822 = vpop.f32.mrf.mxu0
        %v1823 = vpop.f32.mrf.mxu0
        %v1824 = vadd.f32 0.0, %v1823
        %v1825 = vpop.f32.mrf.mxu0
        %1826 = vmatprep.mubr.bf16.mxu0 0
        %1827 = vmatmul.mubr.bf16.gmra.mxu0 %v1770
        %v1828 = vpop.f32.mrf.mxu0
        %v1829 = vadd.f32 0.0, %v1828
        %v1830 = vpop.f32.mrf.mxu0
        %v1831 = vpop.f32.mrf.mxu0
        %v1832 = vadd.f32 0.0, %v1831
        %v1833 = vpop.f32.mrf.mxu0
        %1834 = vmatprep.mubr.bf16.mxu0 0
        %1835 = vmatmul.mubr.bf16.gmra.mxu0 %v1773
        %v1836 = vpop.f32.mrf.mxu0
        %v1837 = vadd.f32 0.0, %v1836
        %v1838 = vpop.f32.mrf.mxu0
        %v1839 = vpop.f32.mrf.mxu0
        %v1840 = vadd.f32 0.0, %v1839
        %v1841 = vpop.f32.mrf.mxu0
        %1842 = vdwg.mxu0
        %v1843 = vadd.f32 %v1734, %v1813
        %v1844 = vadd.f32 %v1735, %v1816
        %v1845 = vadd.f32 %v1736, %v1821
        %v1846 = vadd.f32 %v1737, %v1824
        %v1847 = vadd.f32 %v1738, %v1829
        %v1848 = vadd.f32 %v1739, %v1832
        %v1849 = vadd.f32 %v1740, %v1837
        %v1850 = vadd.f32 %v1741, %v1840
        %s1851 = scalar_lea.vmem %s210, 216
        %v1852 = vld [vmem:[%s1851] sm:$0xf]
        %v1853 = vld [vmem:[%s1851 + $0x4] sm:$0x1]
        %v1854 = vld [vmem:[%s1851 + $0x8] sm:$0xf]
        %v1855 = vld [vmem:[%s1851 + $0xc] sm:$0x1]
        %v1856 = vld [vmem:[%s1851 + $0x10] sm:$0xf]
        %v1857 = vld [vmem:[%s1851 + $0x14] sm:$0x1]
        %v1858 = vld [vmem:[%s1851 + $0x18] sm:$0xf]
        %v1859 = vld [vmem:[%s1851 + $0x1c] sm:$0x1]
        %v1860 = vld [vmem:[%s1851 + $0x20] sm:$0xf]
        %v1861 = vld [vmem:[%s1851 + $0x24] sm:$0x1]
        %v1862 = vld [vmem:[%s1851 + $0x28] sm:$0xf]
        %v1863 = vld [vmem:[%s1851 + $0x2c] sm:$0x1]
        %v1864 = vld [vmem:[%s1851 + $0x30] sm:$0xf]
        %v1865 = vld [vmem:[%s1851 + $0x34] sm:$0x1]
        %v1866 = vld [vmem:[%s1851 + $0x38] sm:$0xf]
        %v1867 = vld [vmem:[%s1851 + $0x3c] sm:$0x1]
        %v1868 = vld [vmem:[%s1851 + $0x40] sm:$0xf]
        %v1869 = vld [vmem:[%s1851 + $0x44] sm:$0x1]
        %s1870 = scalar_lea.vmem %s215, 10
        %v1871 = vld [vmem:[%s1870] sm:$0x3]
        %v1880 = vunpack.c.l.b16 %v1852
        %v1881 = vunpack.c.l.b16 %v1854
        %v1882 = vunpack.c.l.b16 %v1856
        %v1883 = vunpack.c.l.b16 %v1858
        %v1884 = vunpack.c.l.b16 %v1860
        %v1885 = vunpack.c.l.b16 %v1862
        %v1886 = vunpack.c.l.b16 %v1864
        %v1887 = vunpack.c.l.b16 %v1866
        %v1888 = vpack.c.b16 %v1881, %v1880
        %v1889 = vpack.c.b16 %v1883, %v1882
        %v1890 = vpack.c.b16 %v1885, %v1884
        %v1891 = vpack.c.b16 %v1887, %v1886
        %v1893 = vsel %vm261, %v1888, 0
        %v1896 = vsel %vm261, %v1889, 0
        %v1899 = vsel %vm261, %v1890, 0
        %v1902 = vsel %vm261, %v1891, 0
        %v1905 = vsel %vm274, %v1871, 0
        %1907 = vmatprep.subr.bf16.mxu0 0
        %1908 = vmatpush1.bf16.msra.mxu0 0
        %1909 = vmatprep.subr.bf16.mxu0 0
        %1910 = vmatpush1.bf16.msra.mxu0 0
        %1911 = vmatprep.subr.bf16.mxu0 0
        %1912 = vmatpush1.bf16.msra.mxu0 0
        %1913 = vmatprep.subr.bf16.mxu0 0
        %1914 = vmatpush1.bf16.msra.mxu0 0
        %1915 = vmatprep.subr.bf16.mxu0 0
        %1916 = vmatpush1.bf16.msra.mxu0 0
        %1917 = vmatprep.subr.bf16.mxu0 0
        %1918 = vmatpush1.bf16.msra.mxu0 0
        %1919 = vmatprep.subr.bf16.mxu0 0
        %1920 = vmatpush1.bf16.msra.mxu0 0
        %1921 = vmatprep.subr.bf16.mxu0 0
        %1922 = vmatpush1.bf16.msra.mxu0 %v1905
        %1923 = vmatprep.subr.bf16.mxu0 0
        %1924 = vmatpush2.bf16.msra.mxu0 0
        %1925 = vmatprep.subr.bf16.mxu0 0
        %1926 = vmatpush2.bf16.msra.mxu0 0
        %1927 = vmatprep.subr.bf16.mxu0 0
        %1928 = vmatpush2.bf16.msra.mxu0 0
        %1929 = vmatprep.subr.bf16.mxu0 0
        %1930 = vmatpush2.bf16.msra.mxu0 0
        %1931 = vmatprep.subr.bf16.mxu0 0
        %1932 = vmatpush2.bf16.msra.mxu0 0
        %1933 = vmatprep.subr.bf16.mxu0 0
        %1934 = vmatpush2.bf16.msra.mxu0 0
        %1935 = vmatprep.subr.bf16.mxu0 0
        %1936 = vmatpush2.bf16.msra.mxu0 0
        %1937 = vmatprep.subr.bf16.mxu0 0
        %1938 = vmatpush2.bf16.msra.mxu0 0
        %1939 = vmatprep.mubr.bf16.mxu0 0
        %1940 = vmatmul.mubr.bf16.gmra.mxu0 %v1893
        %v1941 = vpop.f32.mrf.mxu0
        %v1942 = vadd.f32 0.0, %v1941
        %v1943 = vpop.f32.mrf.mxu0
        %v1944 = vpop.f32.mrf.mxu0
        %v1945 = vadd.f32 0.0, %v1944
        %v1946 = vpop.f32.mrf.mxu0
        %1947 = vmatprep.mubr.bf16.mxu0 0
        %1948 = vmatmul.mubr.bf16.gmra.mxu0 %v1896
        %v1949 = vpop.f32.mrf.mxu0
        %v1950 = vadd.f32 0.0, %v1949
        %v1951 = vpop.f32.mrf.mxu0
        %v1952 = vpop.f32.mrf.mxu0
        %v1953 = vadd.f32 0.0, %v1952
        %v1954 = vpop.f32.mrf.mxu0
        %1955 = vmatprep.mubr.bf16.mxu0 0
        %1956 = vmatmul.mubr.bf16.gmra.mxu0 %v1899
        %v1957 = vpop.f32.mrf.mxu0
        %v1958 = vadd.f32 0.0, %v1957
        %v1959 = vpop.f32.mrf.mxu0
        %v1960 = vpop.f32.mrf.mxu0
        %v1961 = vadd.f32 0.0, %v1960
        %v1962 = vpop.f32.mrf.mxu0
        %1963 = vmatprep.mubr.bf16.mxu0 0
        %1964 = vmatmul.mubr.bf16.gmra.mxu0 %v1902
        %v1965 = vpop.f32.mrf.mxu0
        %v1966 = vadd.f32 0.0, %v1965
        %v1967 = vpop.f32.mrf.mxu0
        %v1968 = vpop.f32.mrf.mxu0
        %v1969 = vadd.f32 0.0, %v1968
        %v1970 = vpop.f32.mrf.mxu0
        %1971 = vdwg.mxu0
        %v1972 = vadd.f32 %v1843, %v1942
        %v1973 = vadd.f32 %v1844, %v1945
        %v1974 = vadd.f32 %v1845, %v1950
        %v1975 = vadd.f32 %v1846, %v1953
        %v1976 = vadd.f32 %v1847, %v1958
        %v1977 = vadd.f32 %v1848, %v1961
        %v1978 = vadd.f32 %v1849, %v1966
        %v1979 = vadd.f32 %v1850, %v1969
        %s1980 = scalar_lea.vmem %s215, 26
        %v1981 = vld [vmem:[%s1980] sm:$0x3]
        %v1983 = vunpack.c.l.b16 %v1868
        %v1984 = vpack.c.b16 %v1882, %v1881
        %v1985 = vpack.c.b16 %v1884, %v1883
        %v1986 = vpack.c.b16 %v1886, %v1885
        %v1987 = vpack.c.b16 %v1983, %v1887
        %v1989 = vsel %vm261, %v1984, 0
        %v1992 = vsel %vm261, %v1985, 0
        %v1995 = vsel %vm261, %v1986, 0
        %v1998 = vsel %vm261, %v1987, 0
        %v2001 = vsel %vm274, %v1981, 0
        %2003 = vmatprep.subr.bf16.mxu0 0
        %2004 = vmatpush1.bf16.msra.mxu0 0
        %2005 = vmatprep.subr.bf16.mxu0 0
        %2006 = vmatpush1.bf16.msra.mxu0 0
        %2007 = vmatprep.subr.bf16.mxu0 0
        %2008 = vmatpush1.bf16.msra.mxu0 0
        %2009 = vmatprep.subr.bf16.mxu0 0
        %2010 = vmatpush1.bf16.msra.mxu0 0
        %2011 = vmatprep.subr.bf16.mxu0 0
        %2012 = vmatpush1.bf16.msra.mxu0 0
        %2013 = vmatprep.subr.bf16.mxu0 0
        %2014 = vmatpush1.bf16.msra.mxu0 0
        %2015 = vmatprep.subr.bf16.mxu0 0
        %2016 = vmatpush1.bf16.msra.mxu0 0
        %2017 = vmatprep.subr.bf16.mxu0 0
        %2018 = vmatpush1.bf16.msra.mxu0 %v2001
        %2019 = vmatprep.subr.bf16.mxu0 0
        %2020 = vmatpush2.bf16.msra.mxu0 0
        %2021 = vmatprep.subr.bf16.mxu0 0
        %2022 = vmatpush2.bf16.msra.mxu0 0
        %2023 = vmatprep.subr.bf16.mxu0 0
        %2024 = vmatpush2.bf16.msra.mxu0 0
        %2025 = vmatprep.subr.bf16.mxu0 0
        %2026 = vmatpush2.bf16.msra.mxu0 0
        %2027 = vmatprep.subr.bf16.mxu0 0
        %2028 = vmatpush2.bf16.msra.mxu0 0
        %2029 = vmatprep.subr.bf16.mxu0 0
        %2030 = vmatpush2.bf16.msra.mxu0 0
        %2031 = vmatprep.subr.bf16.mxu0 0
        %2032 = vmatpush2.bf16.msra.mxu0 0
        %2033 = vmatprep.subr.bf16.mxu0 0
        %2034 = vmatpush2.bf16.msra.mxu0 0
        %2035 = vmatprep.mubr.bf16.mxu0 0
        %2036 = vmatmul.mubr.bf16.gmra.mxu0 %v1989
        %v2037 = vpop.f32.mrf.mxu0
        %v2038 = vadd.f32 0.0, %v2037
        %v2039 = vpop.f32.mrf.mxu0
        %v2040 = vpop.f32.mrf.mxu0
        %v2041 = vadd.f32 0.0, %v2040
        %v2042 = vpop.f32.mrf.mxu0
        %2043 = vmatprep.mubr.bf16.mxu0 0
        %2044 = vmatmul.mubr.bf16.gmra.mxu0 %v1992
        %v2045 = vpop.f32.mrf.mxu0
        %v2046 = vadd.f32 0.0, %v2045
        %v2047 = vpop.f32.mrf.mxu0
        %v2048 = vpop.f32.mrf.mxu0
        %v2049 = vadd.f32 0.0, %v2048
        %v2050 = vpop.f32.mrf.mxu0
        %2051 = vmatprep.mubr.bf16.mxu0 0
        %2052 = vmatmul.mubr.bf16.gmra.mxu0 %v1995
        %v2053 = vpop.f32.mrf.mxu0
        %v2054 = vadd.f32 0.0, %v2053
        %v2055 = vpop.f32.mrf.mxu0
        %v2056 = vpop.f32.mrf.mxu0
        %v2057 = vadd.f32 0.0, %v2056
        %v2058 = vpop.f32.mrf.mxu0
        %2059 = vmatprep.mubr.bf16.mxu0 0
        %2060 = vmatmul.mubr.bf16.gmra.mxu0 %v1998
        %v2061 = vpop.f32.mrf.mxu0
        %v2062 = vadd.f32 0.0, %v2061
        %v2063 = vpop.f32.mrf.mxu0
        %v2064 = vpop.f32.mrf.mxu0
        %v2065 = vadd.f32 0.0, %v2064
        %v2066 = vpop.f32.mrf.mxu0
        %2067 = vdwg.mxu0
        %v2068 = vadd.f32 %v1972, %v2038
        %v2069 = vadd.f32 %v1973, %v2041
        %v2070 = vadd.f32 %v1974, %v2046
        %v2071 = vadd.f32 %v1975, %v2049
        %v2072 = vadd.f32 %v1976, %v2054
        %v2073 = vadd.f32 %v1977, %v2057
        %v2074 = vadd.f32 %v1978, %v2062
        %v2075 = vadd.f32 %v1979, %v2065
        %v2077 = vshrl.u32 %v1852, 16
        %v2079 = vrot.slane %v2077, 4
        %v2080 = vshll.u32 %v1852, 16
        %v2082 = vrot.slane %v2080, 5
        %v2083 = vor.u32 %v2079, %v2082
        %v2084 = vrot.slane %v2083, 4
        %v2086 = vshll.u32 %v1853, 16
        %v2088 = vrot.slane %v2086, 5
        %v2089 = vsel %vm431, %v2084, %v2088
        %v2091 = vshrl.u32 %v1854, 16
        %v2093 = vrot.slane %v2091, 4
        %v2094 = vshll.u32 %v1854, 16
        %v2096 = vrot.slane %v2094, 5
        %v2097 = vor.u32 %v2093, %v2096
        %v2098 = vrot.slane %v2097, 4
        %v2100 = vshll.u32 %v1855, 16
        %v2102 = vrot.slane %v2100, 5
        %v2103 = vsel %vm431, %v2098, %v2102
        %v2105 = vshrl.u32 %v1856, 16
        %v2107 = vrot.slane %v2105, 4
        %v2108 = vshll.u32 %v1856, 16
        %v2110 = vrot.slane %v2108, 5
        %v2111 = vor.u32 %v2107, %v2110
        %v2112 = vrot.slane %v2111, 4
        %v2114 = vshll.u32 %v1857, 16
        %v2116 = vrot.slane %v2114, 5
        %v2117 = vsel %vm431, %v2112, %v2116
        %v2119 = vshrl.u32 %v1858, 16
        %v2121 = vrot.slane %v2119, 4
        %v2122 = vshll.u32 %v1858, 16
        %v2124 = vrot.slane %v2122, 5
        %v2125 = vor.u32 %v2121, %v2124
        %v2126 = vrot.slane %v2125, 4
        %v2128 = vshll.u32 %v1859, 16
        %v2130 = vrot.slane %v2128, 5
        %v2131 = vsel %vm431, %v2126, %v2130
        %v2133 = vshrl.u32 %v1860, 16
        %v2135 = vrot.slane %v2133, 4
        %v2136 = vshll.u32 %v1860, 16
        %v2138 = vrot.slane %v2136, 5
        %v2139 = vor.u32 %v2135, %v2138
        %v2140 = vrot.slane %v2139, 4
        %v2142 = vshll.u32 %v1861, 16
        %v2144 = vrot.slane %v2142, 5
        %v2145 = vsel %vm431, %v2140, %v2144
        %v2147 = vshrl.u32 %v1862, 16
        %v2149 = vrot.slane %v2147, 4
        %v2150 = vshll.u32 %v1862, 16
        %v2152 = vrot.slane %v2150, 5
        %v2153 = vor.u32 %v2149, %v2152
        %v2154 = vrot.slane %v2153, 4
        %v2156 = vshll.u32 %v1863, 16
        %v2158 = vrot.slane %v2156, 5
        %v2159 = vsel %vm431, %v2154, %v2158
        %v2161 = vshrl.u32 %v1864, 16
        %v2163 = vrot.slane %v2161, 4
        %v2164 = vshll.u32 %v1864, 16
        %v2166 = vrot.slane %v2164, 5
        %v2167 = vor.u32 %v2163, %v2166
        %v2168 = vrot.slane %v2167, 4
        %v2170 = vshll.u32 %v1865, 16
        %v2172 = vrot.slane %v2170, 5
        %v2173 = vsel %vm431, %v2168, %v2172
        %v2175 = vshrl.u32 %v1866, 16
        %v2177 = vrot.slane %v2175, 4
        %v2178 = vshll.u32 %v1866, 16
        %v2180 = vrot.slane %v2178, 5
        %v2181 = vor.u32 %v2177, %v2180
        %v2182 = vrot.slane %v2181, 4
        %v2184 = vshll.u32 %v1867, 16
        %v2186 = vrot.slane %v2184, 5
        %v2187 = vsel %vm431, %v2182, %v2186
        %s2188 = scalar_lea.vmem %s215, 14
        %v2189 = vld [vmem:[%s2188] sm:$0x3]
        %v2190 = vunpack.c.l.b16 %v2089
        %v2191 = vunpack.c.l.b16 %v2103
        %v2192 = vunpack.c.l.b16 %v2117
        %v2193 = vunpack.c.l.b16 %v2131
        %v2194 = vunpack.c.l.b16 %v2145
        %v2195 = vunpack.c.l.b16 %v2159
        %v2196 = vunpack.c.l.b16 %v2173
        %v2197 = vunpack.c.l.b16 %v2187
        %v2198 = vpack.c.b16 %v2191, %v2190
        %v2199 = vpack.c.b16 %v2193, %v2192
        %v2200 = vpack.c.b16 %v2195, %v2194
        %v2201 = vpack.c.b16 %v2197, %v2196
        %v2203 = vsel %vm261, %v2198, 0
        %v2206 = vsel %vm261, %v2199, 0
        %v2209 = vsel %vm261, %v2200, 0
        %v2212 = vsel %vm261, %v2201, 0
        %v2215 = vsel %vm274, %v2189, 0
        %2217 = vmatprep.subr.bf16.mxu0 0
        %2218 = vmatpush1.bf16.msra.mxu0 0
        %2219 = vmatprep.subr.bf16.mxu0 0
        %2220 = vmatpush1.bf16.msra.mxu0 0
        %2221 = vmatprep.subr.bf16.mxu0 0
        %2222 = vmatpush1.bf16.msra.mxu0 0
        %2223 = vmatprep.subr.bf16.mxu0 0
        %2224 = vmatpush1.bf16.msra.mxu0 0
        %2225 = vmatprep.subr.bf16.mxu0 0
        %2226 = vmatpush1.bf16.msra.mxu0 0
        %2227 = vmatprep.subr.bf16.mxu0 0
        %2228 = vmatpush1.bf16.msra.mxu0 0
        %2229 = vmatprep.subr.bf16.mxu0 0
        %2230 = vmatpush1.bf16.msra.mxu0 0
        %2231 = vmatprep.subr.bf16.mxu0 0
        %2232 = vmatpush1.bf16.msra.mxu0 %v2215
        %2233 = vmatprep.subr.bf16.mxu0 0
        %2234 = vmatpush2.bf16.msra.mxu0 0
        %2235 = vmatprep.subr.bf16.mxu0 0
        %2236 = vmatpush2.bf16.msra.mxu0 0
        %2237 = vmatprep.subr.bf16.mxu0 0
        %2238 = vmatpush2.bf16.msra.mxu0 0
        %2239 = vmatprep.subr.bf16.mxu0 0
        %2240 = vmatpush2.bf16.msra.mxu0 0
        %2241 = vmatprep.subr.bf16.mxu0 0
        %2242 = vmatpush2.bf16.msra.mxu0 0
        %2243 = vmatprep.subr.bf16.mxu0 0
        %2244 = vmatpush2.bf16.msra.mxu0 0
        %2245 = vmatprep.subr.bf16.mxu0 0
        %2246 = vmatpush2.bf16.msra.mxu0 0
        %2247 = vmatprep.subr.bf16.mxu0 0
        %2248 = vmatpush2.bf16.msra.mxu0 0
        %2249 = vmatprep.mubr.bf16.mxu0 0
        %2250 = vmatmul.mubr.bf16.gmra.mxu0 %v2203
        %v2251 = vpop.f32.mrf.mxu0
        %v2252 = vadd.f32 0.0, %v2251
        %v2253 = vpop.f32.mrf.mxu0
        %v2254 = vpop.f32.mrf.mxu0
        %v2255 = vadd.f32 0.0, %v2254
        %v2256 = vpop.f32.mrf.mxu0
        %2257 = vmatprep.mubr.bf16.mxu0 0
        %2258 = vmatmul.mubr.bf16.gmra.mxu0 %v2206
        %v2259 = vpop.f32.mrf.mxu0
        %v2260 = vadd.f32 0.0, %v2259
        %v2261 = vpop.f32.mrf.mxu0
        %v2262 = vpop.f32.mrf.mxu0
        %v2263 = vadd.f32 0.0, %v2262
        %v2264 = vpop.f32.mrf.mxu0
        %2265 = vmatprep.mubr.bf16.mxu0 0
        %2266 = vmatmul.mubr.bf16.gmra.mxu0 %v2209
        %v2267 = vpop.f32.mrf.mxu0
        %v2268 = vadd.f32 0.0, %v2267
        %v2269 = vpop.f32.mrf.mxu0
        %v2270 = vpop.f32.mrf.mxu0
        %v2271 = vadd.f32 0.0, %v2270
        %v2272 = vpop.f32.mrf.mxu0
        %2273 = vmatprep.mubr.bf16.mxu0 0
        %2274 = vmatmul.mubr.bf16.gmra.mxu0 %v2212
        %v2275 = vpop.f32.mrf.mxu0
        %v2276 = vadd.f32 0.0, %v2275
        %v2277 = vpop.f32.mrf.mxu0
        %v2278 = vpop.f32.mrf.mxu0
        %v2279 = vadd.f32 0.0, %v2278
        %v2280 = vpop.f32.mrf.mxu0
        %2281 = vdwg.mxu0
        %v2282 = vadd.f32 %v2068, %v2252
        %v2283 = vadd.f32 %v2069, %v2255
        %v2284 = vadd.f32 %v2070, %v2260
        %v2285 = vadd.f32 %v2071, %v2263
        %v2286 = vadd.f32 %v2072, %v2268
        %v2287 = vadd.f32 %v2073, %v2271
        %v2288 = vadd.f32 %v2074, %v2276
        %v2289 = vadd.f32 %v2075, %v2279
        %v2291 = vshrl.u32 %v1868, 16
        %v2293 = vrot.slane %v2291, 4
        %v2294 = vshll.u32 %v1868, 16
        %v2296 = vrot.slane %v2294, 5
        %v2297 = vor.u32 %v2293, %v2296
        %v2298 = vrot.slane %v2297, 4
        %v2300 = vshll.u32 %v1869, 16
        %v2302 = vrot.slane %v2300, 5
        %v2303 = vsel %vm431, %v2298, %v2302
        %s2304 = scalar_lea.vmem %s215, 30
        %v2305 = vld [vmem:[%s2304] sm:$0x3]
        %v2306 = vunpack.c.l.b16 %v2303
        %v2307 = vpack.c.b16 %v2192, %v2191
        %v2308 = vpack.c.b16 %v2194, %v2193
        %v2309 = vpack.c.b16 %v2196, %v2195
        %v2310 = vpack.c.b16 %v2306, %v2197
        %v2312 = vsel %vm261, %v2307, 0
        %v2315 = vsel %vm261, %v2308, 0
        %v2318 = vsel %vm261, %v2309, 0
        %v2321 = vsel %vm261, %v2310, 0
        %v2324 = vsel %vm274, %v2305, 0
        %2326 = vmatprep.subr.bf16.mxu0 0
        %2327 = vmatpush1.bf16.msra.mxu0 0
        %2328 = vmatprep.subr.bf16.mxu0 0
        %2329 = vmatpush1.bf16.msra.mxu0 0
        %2330 = vmatprep.subr.bf16.mxu0 0
        %2331 = vmatpush1.bf16.msra.mxu0 0
        %2332 = vmatprep.subr.bf16.mxu0 0
        %2333 = vmatpush1.bf16.msra.mxu0 0
        %2334 = vmatprep.subr.bf16.mxu0 0
        %2335 = vmatpush1.bf16.msra.mxu0 0
        %2336 = vmatprep.subr.bf16.mxu0 0
        %2337 = vmatpush1.bf16.msra.mxu0 0
        %2338 = vmatprep.subr.bf16.mxu0 0
        %2339 = vmatpush1.bf16.msra.mxu0 0
        %2340 = vmatprep.subr.bf16.mxu0 0
        %2341 = vmatpush1.bf16.msra.mxu0 %v2324
        %2342 = vmatprep.subr.bf16.mxu0 0
        %2343 = vmatpush2.bf16.msra.mxu0 0
        %2344 = vmatprep.subr.bf16.mxu0 0
        %2345 = vmatpush2.bf16.msra.mxu0 0
        %2346 = vmatprep.subr.bf16.mxu0 0
        %2347 = vmatpush2.bf16.msra.mxu0 0
        %2348 = vmatprep.subr.bf16.mxu0 0
        %2349 = vmatpush2.bf16.msra.mxu0 0
        %2350 = vmatprep.subr.bf16.mxu0 0
        %2351 = vmatpush2.bf16.msra.mxu0 0
        %2352 = vmatprep.subr.bf16.mxu0 0
        %2353 = vmatpush2.bf16.msra.mxu0 0
        %2354 = vmatprep.subr.bf16.mxu0 0
        %2355 = vmatpush2.bf16.msra.mxu0 0
        %2356 = vmatprep.subr.bf16.mxu0 0
        %2357 = vmatpush2.bf16.msra.mxu0 0
        %2358 = vmatprep.mubr.bf16.mxu0 0
        %2359 = vmatmul.mubr.bf16.gmra.mxu0 %v2312
        %v2360 = vpop.f32.mrf.mxu0
        %v2361 = vadd.f32 0.0, %v2360
        %v2362 = vpop.f32.mrf.mxu0
        %v2363 = vpop.f32.mrf.mxu0
        %v2364 = vadd.f32 0.0, %v2363
        %v2365 = vpop.f32.mrf.mxu0
        %2366 = vmatprep.mubr.bf16.mxu0 0
        %2367 = vmatmul.mubr.bf16.gmra.mxu0 %v2315
        %v2368 = vpop.f32.mrf.mxu0
        %v2369 = vadd.f32 0.0, %v2368
        %v2370 = vpop.f32.mrf.mxu0
        %v2371 = vpop.f32.mrf.mxu0
        %v2372 = vadd.f32 0.0, %v2371
        %v2373 = vpop.f32.mrf.mxu0
        %2374 = vmatprep.mubr.bf16.mxu0 0
        %2375 = vmatmul.mubr.bf16.gmra.mxu0 %v2318
        %v2376 = vpop.f32.mrf.mxu0
        %v2377 = vadd.f32 0.0, %v2376
        %v2378 = vpop.f32.mrf.mxu0
        %v2379 = vpop.f32.mrf.mxu0
        %v2380 = vadd.f32 0.0, %v2379
        %v2381 = vpop.f32.mrf.mxu0
        %2382 = vmatprep.mubr.bf16.mxu0 0
        %2383 = vmatmul.mubr.bf16.gmra.mxu0 %v2321
        %v2384 = vpop.f32.mrf.mxu0
        %v2385 = vadd.f32 0.0, %v2384
        %v2386 = vpop.f32.mrf.mxu0
        %v2387 = vpop.f32.mrf.mxu0
        %v2388 = vadd.f32 0.0, %v2387
        %v2389 = vpop.f32.mrf.mxu0
        %2390 = vdwg.mxu0
        %v2391 = vadd.f32 %v2282, %v2361
        %v2392 = vadd.f32 %v2283, %v2364
        %v2393 = vadd.f32 %v2284, %v2369
        %v2394 = vadd.f32 %v2285, %v2372
        %v2395 = vadd.f32 %v2286, %v2377
        %v2396 = vadd.f32 %v2287, %v2380
        %v2397 = vadd.f32 %v2288, %v2385
        %v2398 = vadd.f32 %v2289, %v2388
        %v2399 = vld [vmem:[%s218] sm:$0x1]
        %v2401 = vlaneseq
        %v2402 = vshrl.u32 %v2401, 7
        %v2403 = vsub.s32 0, %v2402
        %v2404 = vrot.slane %v2399, %v2403
        %v2406 = vadd.f32 %v2391, %v2404
        %v2407 = vadd.f32 %v2392, %v2404
        %v2408 = vadd.f32 %v2393, %v2404
        %v2409 = vadd.f32 %v2394, %v2404
        %v2410 = vadd.f32 %v2395, %v2404
        %v2411 = vadd.f32 %v2396, %v2404
        %v2412 = vadd.f32 %v2397, %v2404
        %v2413 = vadd.f32 %v2398, %v2404
        %vm2414 = vcmask 64512
        %v2415 = vsel %vm2414, %v2406, 0.0
        %v2416 = vsel %vm2414, %v2407, 0.0
        %v2417 = vadd.f32 %v2415, %v2416
        %v2418 = vsel %vm2414, %v2408, 0.0
        %v2419 = vadd.f32 %v2417, %v2418
        %v2420 = vsel %vm2414, %v2409, 0.0
        %v2421 = vadd.f32 %v2419, %v2420
        %v2422 = vsel %vm2414, %v2410, 0.0
        %v2423 = vadd.f32 %v2421, %v2422
        %v2424 = vsel %vm2414, %v2411, 0.0
        %v2425 = vadd.f32 %v2423, %v2424
        %v2426 = vsel %vm2414, %v2412, 0.0
        %v2427 = vadd.f32 %v2425, %v2426
        %v2428 = vsel %vm2414, %v2413, 0.0
        %v2429 = vadd.f32 %v2427, %v2428
        %v2430 = vrot.slane %v2429, 4
        %v2431 = vadd.f32 %v2429, %v2430
        %v2432 = vrot.slane %v2431, 2
        %v2433 = vadd.f32 %v2431, %v2432
        %v2434 = vrot.slane %v2433, 1
        %v2435 = vadd.f32 %v2433, %v2434
        %v2436 = vmul.f32 %v2406, %v2406
        %v2437 = vmul.f32 %v2407, %v2407
        %v2438 = vmul.f32 %v2408, %v2408
        %v2439 = vmul.f32 %v2409, %v2409
        %v2440 = vmul.f32 %v2410, %v2410
        %v2441 = vmul.f32 %v2411, %v2411
        %v2442 = vmul.f32 %v2412, %v2412
        %v2443 = vmul.f32 %v2413, %v2413
        %v2444 = vsel %vm2414, %v2436, 0.0
        %v2445 = vsel %vm2414, %v2437, 0.0
        %v2446 = vadd.f32 %v2444, %v2445
        %v2447 = vsel %vm2414, %v2438, 0.0
        %v2448 = vadd.f32 %v2446, %v2447
        %v2449 = vsel %vm2414, %v2439, 0.0
        %v2450 = vadd.f32 %v2448, %v2449
        %v2451 = vsel %vm2414, %v2440, 0.0
        %v2452 = vadd.f32 %v2450, %v2451
        %v2453 = vsel %vm2414, %v2441, 0.0
        %v2454 = vadd.f32 %v2452, %v2453
        %v2455 = vsel %vm2414, %v2442, 0.0
        %v2456 = vadd.f32 %v2454, %v2455
        %v2457 = vsel %vm2414, %v2443, 0.0
        %v2458 = vadd.f32 %v2456, %v2457
        %v2459 = vrot.slane %v2458, 4
        %v2460 = vadd.f32 %v2458, %v2459
        %v2461 = vrot.slane %v2460, 2
        %v2462 = vadd.f32 %v2460, %v2461
        %v2463 = vrot.slane %v2462, 1
        %v2464 = vadd.f32 %v2462, %v2463
        %v2465 = vmul.f32 %v2435, 0.015625
        %v2466 = vmul.f32 %v2464, 0.015625
        %v2467 = vmul.f32 %v2465, %v2465
        %v2468 = vsub.f32 %v2466, %v2467
        %v2469 = vmax.f32 %v2468, 0.0
        %v2470 = vadd.f32 %v2469, 1e-05
        %v2471 = vrsqrt.pop %v2470
        %v2472 = vsub.f32 0.0, %v2465
        %v2473 = vmul.f32 %v2472, %v2471
        %v2474 = vmul.f32 %v2406, %v2471
        %v2475 = vmul.f32 %v2407, %v2471
        %v2476 = vmul.f32 %v2408, %v2471
        %v2477 = vmul.f32 %v2409, %v2471
        %v2478 = vmul.f32 %v2410, %v2471
        %v2479 = vmul.f32 %v2411, %v2471
        %v2480 = vmul.f32 %v2412, %v2471
        %v2481 = vmul.f32 %v2413, %v2471
        %v2482 = vadd.f32 %v2474, %v2473
        %v2483 = vadd.f32 %v2475, %v2473
        %v2484 = vadd.f32 %v2476, %v2473
        %v2485 = vadd.f32 %v2477, %v2473
        %v2486 = vadd.f32 %v2478, %v2473
        %v2487 = vadd.f32 %v2479, %v2473
        %v2488 = vadd.f32 %v2480, %v2473
        %v2489 = vadd.f32 %v2481, %v2473
        %v2490 = vmul.f32 %v2482, 0.2
        %v2491 = vmul.f32 %v2483, 0.2
        %v2492 = vmul.f32 %v2484, 0.2
        %v2493 = vmul.f32 %v2485, 0.2
        %v2494 = vmul.f32 %v2486, 0.2
        %v2495 = vmul.f32 %v2487, 0.2
        %v2496 = vmul.f32 %v2488, 0.2
        %v2497 = vmul.f32 %v2489, 0.2
        %v2498 = vmax.f32 %v2482, %v2490
        %v2499 = vmax.f32 %v2483, %v2491
        %v2500 = vmax.f32 %v2484, %v2492
        %v2501 = vmax.f32 %v2485, %v2493
        %v2502 = vmax.f32 %v2486, %v2494
        %v2503 = vmax.f32 %v2487, %v2495
        %v2504 = vmax.f32 %v2488, %v2496
        %v2505 = vmax.f32 %v2489, %v2497
        %2506 = vst.msk [vmem:[%s204] sm:$0xff] %vm2414, %v2498
        %2507 = vst.msk [vmem:[%s204 + $0x8] sm:$0xff] %vm2414, %v2499
        %2508 = vst.msk [vmem:[%s204 + $0x10] sm:$0xff] %vm2414, %v2500
        %2509 = vst.msk [vmem:[%s204 + $0x18] sm:$0xff] %vm2414, %v2501
        %2510 = vst.msk [vmem:[%s204 + $0x20] sm:$0xff] %vm2414, %v2502
        %2511 = vst.msk [vmem:[%s204 + $0x28] sm:$0xff] %vm2414, %v2503
        %2512 = vst.msk [vmem:[%s204 + $0x30] sm:$0xff] %vm2414, %v2504
        %2513 = vst.msk [vmem:[%s204 + $0x38] sm:$0xff] %vm2414, %v2505
        %s2514 = sand.u32 %s117, 1
        %s2515 = scalar_lea.sflag [#allocation3], %s2514
        %s2516 = sand.u32 %s117, 1
        %s2517 = smul.addr %s2516, 64
        %s2518 = scalar_lea.vmem [#allocation2], %s2517
        // Predicated region
        $region33: #{tpu_custom_call.1} parent=31 // pred_check
          %p2519 = pneg %p127
        $region34: #{tpu_custom_call.1} parent=31 // pred_check_branch
          %2521 = sbr.rel (%p2519) target = $region36
        $region35: #{tpu_custom_call.1} parent=31 // pred_region
          %s2523 = ssub.s32 1024, 1024
          %2524 = vsyncadd %s2515, %s2523
          %s2525 = smul.addr %s21, 8
          %s2526 = sadd.s32 %s22, %s2525
          %s2527 = smul.addr %s2526, 128
          %s2528 = scalar_lea.hbm %s3, %s2527
          %s2529 = sshll.u32 %s2518, 4
          %s2530 = int_to_ptr.vmem [resolvable:$true] %s2529
          %2535 = dma.vmem_to_hbm [thread:$0]  %s2530, 1024, %s2528, %s2515, 128, 128, 8
        $region36: #{tpu_custom_call.1} parent=31 // pred_fallthru
          _
      $region32: #{tpu_custom_call.1} parent=5 // pred_fallthru
        _
      %p2536 = scmp.le.s32.totalorder 2, %s12
      // Predicated region
      $region37: #{tpu_custom_call.1} parent=5 // pred_check
        %p2537 = pneg %p2536
      $region38: #{tpu_custom_call.1} parent=5 // pred_check_branch
        %2539 = sbr.rel (%p2537) target = $region40
      $region39: #{tpu_custom_call.1} parent=5 // pred_region
        %s2540 = ssub.s32 %s12, 2
        // Predicated region
        $region41: #{tpu_custom_call.1} parent=39 // pred_check
          %p2541 = pneg %p133
        $region42: #{tpu_custom_call.1} parent=39 // pred_check_branch
          %2543 = sbr.rel (%p2541) target = $region44
        $region43: #{tpu_custom_call.1} parent=39 // pred_region
          %s2544 = sand.u32 %s118, 1
          %s2545 = scalar_lea.sflag [#allocation3], %s2544
          %s2546 = sand.u32 %s118, 1
          %s2547 = smul.addr %s2546, 64
          %s2548 = scalar_lea.vmem [#allocation2], %s2547
          %2549 = dma.done %s2545, 1024
        $region44: #{tpu_custom_call.1} parent=39 // pred_fallthru
          _
      $region40: #{tpu_custom_call.1} parent=5 // pred_fallthru
        _
    $region6: #{tpu_custom_call.1} parent=1 // loop_footer
      %s16 = sadd.s32 1, %s12
    $region7: #{tpu_custom_call.1} parent=1 // loop_footer_branch
      %11 = sbr.rel target = $region3
    $region8: #{tpu_custom_call.1} parent=1 // loop_exit
      _
    %2550 = vsyncpa [#allocation3], 1
    %s2551 = scalar_lea.sflag [#allocation3], 1
    %2552 = vsyncpa %s2551, 1

</llo_original>
